<compile_context>
chip_gen: v6e
topology: v6e:2x2x1
jax: 0.10.0
libtpu: 0.0.40
codegen_flags: <defaults>
</compile_context>

<pallas_src>
import functools

import jax
import jax.numpy as jnp
from jax.experimental import pallas as pl
from jax.experimental.pallas import tpu as pltpu


_SQRT_2_OVER_PI = 0.7978845608028654


def _gelu_tanh(x):
    # tanh-approximate GELU.  torch F.gelu defaults to the exact erf form; the
    # tanh approximation differs by <1e-3 per element.
    # TODO(synk): switch to erf-based GELU if exact torch parity is required.
    return 0.5 * x * (1.0 + jnp.tanh(_SQRT_2_OVER_PI * (x + 0.044715 * x * x * x)))


def _ensemble_head_kernel(pooled_ref, g_ref, beta_ref, w1_ref, b1_ref,
                          w2_ref, b2_ref, wc_ref, bc_ref, wmix_ref,
                          out_ref, *, eps, num_models):
    """One batch tile: run all M per-model heads (unrolled) and combine."""
    acc = jnp.zeros(out_ref.shape, jnp.float32)

    for m in range(num_models):  # M == 3, fully unrolled at trace time
        x = pooled_ref[m].astype(jnp.float32)                    # (bb, H)
        # dropout1 / dropout2: eval-mode identity.
        # TODO(synk): train-mode dropout (p=0.4 / p=0.3) not implemented.

        # LayerNorm over hidden dim (torch default: eps=1e-5, biased variance).
        mu = jnp.mean(x, axis=-1, keepdims=True)
        xc = x - mu
        var = jnp.mean(xc * xc, axis=-1, keepdims=True)
        xn = xc * jax.lax.rsqrt(var + eps)
        xn = xn * g_ref[m] + beta_ref[m]

        # Block 1: Linear + GELU + residual (bf16 MXU operands, f32 accum).
        h = jnp.dot(xn.astype(jnp.bfloat16), w1_ref[m],
                    preferred_element_type=jnp.float32) + b1_ref[m]
        x1 = _gelu_tanh(h) + xn

        # Block 2: Linear + GELU + residual.
        h = jnp.dot(x1.astype(jnp.bfloat16), w2_ref[m],
                    preferred_element_type=jnp.float32) + b2_ref[m]
        x2 = _gelu_tanh(h) + x1

        # Classifier head.
        logits = jnp.dot(x2.astype(jnp.bfloat16), wc_ref[m],
                         preferred_element_type=jnp.float32) + bc_ref[m]

        # wmix = softmax(ensemble weights, 0) / temperature (precomputed).
        acc = acc + logits * wmix_ref[m]

    out_ref[...] = acc


def _round_up(x, m):
    return (x + m - 1) // m * m


def ensemble_forward(pooled, ln_gamma, ln_beta, w1, b1, w2, b2, wc, bc,
                     ens_weights, temperature, *, block_b=256, eps=1e-5,
                     vmem_limit_bytes=None):
    """Pallas forward of EnsembleClassifier given per-model pooled features.

    pooled      : (M, B, H) backbone pooler outputs
    ln_gamma/β  : (M, H)    per-model LayerNorm params
    w1, w2      : (M, H, H) intermediate Linear weights, (in, out) layout
    b1, b2      : (M, H)
    wc          : (M, H, C) classifier weights, (in, out) layout
    bc          : (M, C)
    ens_weights : (M, C)    EnsembleClassifier.weights (pre-softmax)
    temperature : (C,)
    returns     : (B, C) float32
    """
    M, B, H = pooled.shape
    C = wc.shape[-1]

    # Hoisted ensemble combine: softmax over models, folded temperature.
    wmix = (jax.nn.softmax(ens_weights.astype(jnp.float32), axis=0)
            / temperature.astype(jnp.float32)[None, :])           # (M, C)

    # Lane-pad the class dim to 128 (unmasked output stores, dense MXU cols).
    C_pad = _round_up(C, 128)
    if C_pad != C:
        wc = jnp.pad(wc, ((0, 0), (0, 0), (0, C_pad - C)))
        bc = jnp.pad(bc, ((0, 0), (0, C_pad - C)))
        wmix = jnp.pad(wmix, ((0, 0), (0, C_pad - C)))

    # Batch tile: multiple of 8 (sublane), padded with zero rows if needed.
    # For v7x (2 TCs) pick block_b so B_pad // bb >= 2 when B is large.
    bb = min(_round_up(block_b, 8), _round_up(B, 8))
    B_pad = _round_up(B, bb)
    if B_pad != B:
        pooled = jnp.pad(pooled, ((0, 0), (0, B_pad - B), (0, 0)))

    # bf16 matmul operands (MXU-native on v5e/v6e/v7x); halves weight VMEM.
    w1 = w1.astype(jnp.bfloat16)
    w2 = w2.astype(jnp.bfloat16)
    wc = wc.astype(jnp.bfloat16)

    g3 = ln_gamma.reshape(M, 1, H).astype(jnp.float32)
    be3 = ln_beta.reshape(M, 1, H).astype(jnp.float32)
    b1r = b1.reshape(M, 1, H).astype(jnp.float32)
    b2r = b2.reshape(M, 1, H).astype(jnp.float32)
    bcr = bc.reshape(M, 1, C_pad).astype(jnp.float32)
    wmixr = wmix.reshape(M, 1, C_pad)

    resident = lambda i: (0, 0, 0)   # constant block index -> fetched once
    grid = (B_pad // bb,)
    kernel = functools.partial(_ensemble_head_kernel, eps=float(eps),
                               num_models=M)

    out = pl.pallas_call(
        kernel,
        out_shape=jax.ShapeDtypeStruct((B_pad, C_pad), jnp.float32),
        grid_spec=pltpu.PrefetchScalarGridSpec(
            num_scalar_prefetch=0,
            grid=grid,
            in_specs=[
                pl.BlockSpec((M, bb, H), lambda i: (0, i, 0)),    # pooled
                pl.BlockSpec((M, 1, H), resident),                # ln gamma
                pl.BlockSpec((M, 1, H), resident),                # ln beta
                pl.BlockSpec((M, H, H), resident),                # W1 (bf16)
                pl.BlockSpec((M, 1, H), resident),                # b1
                pl.BlockSpec((M, H, H), resident),                # W2 (bf16)
                pl.BlockSpec((M, 1, H), resident),                # b2
                pl.BlockSpec((M, H, C_pad), resident),            # Wc (bf16)
                pl.BlockSpec((M, 1, C_pad), resident),            # bc
                pl.BlockSpec((M, 1, C_pad), resident),            # softmax(w)/temp
            ],
            out_specs=pl.BlockSpec((bb, C_pad), lambda i: (i, 0)),
        ),
        compiler_params=pltpu.CompilerParams(
            dimension_semantics=("parallel",),
            vmem_limit_bytes=vmem_limit_bytes,
        ),
    )(pooled, g3, be3, w1, b1r, w2, b2r, wc, bcr, wmixr)
    return out[:B, :C]


def _ensemble_forward_ref(pooled, ln_gamma, ln_beta, w1, b1, w2, b2, wc, bc,
                          ens_weights, temperature, eps=1e-5):
    """Pure-JAX f32 reference (mirrors the torch forward, tanh GELU)."""
    x = pooled.astype(jnp.float32)
    mu = x.mean(-1, keepdims=True)
    var = ((x - mu) ** 2).mean(-1, keepdims=True)
    xn = (x - mu) / jnp.sqrt(var + eps)
    xn = xn * ln_gamma[:, None, :] + ln_beta[:, None, :]
    h = _gelu_tanh(jnp.einsum('mbh,mhk->mbk', xn, w1) + b1[:, None, :])
    x1 = h + xn
    h = _gelu_tanh(jnp.einsum('mbh,mhk->mbk', x1, w2) + b2[:, None, :])
    x2 = h + x1
    logits = jnp.einsum('mbh,mhc->mbc', x2, wc) + bc[:, None, :]
    w = jax.nn.softmax(ens_weights.astype(jnp.float32), axis=0)       # (M, C)
    weighted = (logits * w[:, None, :]).sum(0)
    return weighted / temperature[None, :]


if __name__ == "__main__":
    key = jax.random.PRNGKey(0)
    M, B, H, C = 3, 8, 256, 8   # 3 backbones, small batch / hidden / n_classes
    ks = jax.random.split(key, 11)

    pooled = jax.random.normal(ks[0], (M, B, H), dtype=jnp.float32)
    ln_gamma = 1.0 + 0.1 * jax.random.normal(ks[1], (M, H), dtype=jnp.float32)
    ln_beta = 0.1 * jax.random.normal(ks[2], (M, H), dtype=jnp.float32)
    w1 = jax.random.normal(ks[3], (M, H, H), dtype=jnp.float32) / jnp.sqrt(H)
    b1 = 0.02 * jax.random.normal(ks[4], (M, H), dtype=jnp.float32)
    w2 = jax.random.normal(ks[5], (M, H, H), dtype=jnp.float32) / jnp.sqrt(H)
    b2 = 0.02 * jax.random.normal(ks[6], (M, H), dtype=jnp.float32)
    wc = jax.random.normal(ks[7], (M, H, C), dtype=jnp.float32) / jnp.sqrt(H)
    bc = 0.02 * jax.random.normal(ks[8], (M, C), dtype=jnp.float32)
    ens_w = jax.random.normal(ks[9], (M, C), dtype=jnp.float32)
    temperature = 1.0 + 0.2 * jax.random.uniform(ks[10], (C,), dtype=jnp.float32)

    out = ensemble_forward(pooled, ln_gamma, ln_beta, w1, b1, w2, b2, wc, bc,
                           ens_w, temperature)
    out = jax.block_until_ready(out)

    ref = _ensemble_forward_ref(pooled, ln_gamma, ln_beta, w1, b1, w2, b2, wc,
                                bc, ens_w, temperature)
    assert out.shape == (B, C)
    # Looser tolerance than v1: matmul operands are bf16 (f32 accumulation).
    assert jnp.allclose(out, ref, rtol=5e-2, atol=5e-2), (
        float(jnp.max(jnp.abs(out - ref))), out, ref)

    print("KERNEL_OK")
</pallas_src>

<mosaic_0001>
module attributes {stable_mosaic.version = 11 : i64} {
  func.func @_ensemble_head_kernel(%arg0: i32, %arg1: memref<3x8x256xf32, #tpu.memory_space<vmem>>, %arg2: memref<3x1x256xf32, #tpu.memory_space<vmem>>, %arg3: memref<3x1x256xf32, #tpu.memory_space<vmem>>, %arg4: memref<3x256x256xbf16, #tpu.memory_space<vmem>>, %arg5: memref<3x1x256xf32, #tpu.memory_space<vmem>>, %arg6: memref<3x256x256xbf16, #tpu.memory_space<vmem>>, %arg7: memref<3x1x256xf32, #tpu.memory_space<vmem>>, %arg8: memref<3x256x128xbf16, #tpu.memory_space<vmem>>, %arg9: memref<3x1x128xf32, #tpu.memory_space<vmem>>, %arg10: memref<3x1x128xf32, #tpu.memory_space<vmem>>, %arg11: memref<8x128xf32, #tpu.memory_space<vmem>>) attributes {dimension_semantics = [#tpu.dimension_semantics<parallel>], iteration_bounds = array<i64: 1>, scalar_prefetch = 0 : i64, scratch_operands = 0 : i64, tpu.core_type = #tpu.core_type<tc>, window_params = [{transform_indices = @transform_0, window_bounds = array<i64: 3, 8, 256>}, {pipeline_mode = #tpu.pipeline_mode<synchronous>, transform_indices = @transform_1, window_bounds = array<i64: 3, 1, 256>}, {pipeline_mode = #tpu.pipeline_mode<synchronous>, transform_indices = @transform_2, window_bounds = array<i64: 3, 1, 256>}, {pipeline_mode = #tpu.pipeline_mode<synchronous>, transform_indices = @transform_3, window_bounds = array<i64: 3, 256, 256>}, {pipeline_mode = #tpu.pipeline_mode<synchronous>, transform_indices = @transform_4, window_bounds = array<i64: 3, 1, 256>}, {pipeline_mode = #tpu.pipeline_mode<synchronous>, transform_indices = @transform_5, window_bounds = array<i64: 3, 256, 256>}, {pipeline_mode = #tpu.pipeline_mode<synchronous>, transform_indices = @transform_6, window_bounds = array<i64: 3, 1, 256>}, {pipeline_mode = #tpu.pipeline_mode<synchronous>, transform_indices = @transform_7, window_bounds = array<i64: 3, 256, 128>}, {pipeline_mode = #tpu.pipeline_mode<synchronous>, transform_indices = @transform_8, window_bounds = array<i64: 3, 1, 128>}, {pipeline_mode = #tpu.pipeline_mode<synchronous>, transform_indices = @transform_9, window_bounds = array<i64: 3, 1, 128>}, {transform_indices = @transform_10, window_bounds = array<i64: 8, 128>}]} {
    %cst = arith.constant 0.000000e+00 : f32
    %0 = vector.broadcast %cst : f32 to vector<8x128xf32>
    %c0 = arith.constant 0 : index
    %c0_0 = arith.constant 0 : index
    %c0_1 = arith.constant 0 : index
    %1 = vector.load %arg1[%c0, %c0_0, %c0_1] : memref<3x8x256xf32, #tpu.memory_space<vmem>>, vector<1x8x256xf32>
    %2 = vector.shape_cast %1 : vector<1x8x256xf32> to vector<8x256xf32>
    %cst_2 = arith.constant dense<0.000000e+00> : vector<8xf32>
    %3 = vector.multi_reduction <add>, %2, %cst_2 [1] : vector<8x256xf32> to vector<8xf32>
    %4 = vector.shape_cast %3 : vector<8xf32> to vector<8x1xf32>
    %cst_3 = arith.constant 2.560000e+02 : f32
    %5 = vector.broadcast %cst_3 : f32 to vector<8x1xf32>
    %6 = arith.divf %4, %5 : vector<8x1xf32>
    %7 = vector.broadcast %6 : vector<8x1xf32> to vector<8x256xf32>
    %8 = arith.subf %2, %7 : vector<8x256xf32>
    %9 = arith.mulf %8, %8 : vector<8x256xf32>
    %cst_4 = arith.constant dense<0.000000e+00> : vector<8xf32>
    %10 = vector.multi_reduction <add>, %9, %cst_4 [1] : vector<8x256xf32> to vector<8xf32>
    %11 = vector.shape_cast %10 : vector<8xf32> to vector<8x1xf32>
    %cst_5 = arith.constant 2.560000e+02 : f32
    %12 = vector.broadcast %cst_5 : f32 to vector<8x1xf32>
    %13 = arith.divf %11, %12 : vector<8x1xf32>
    %cst_6 = arith.constant 9.99999974E-6 : f32
    %14 = vector.broadcast %cst_6 : f32 to vector<8x1xf32>
    %15 = arith.addf %13, %14 : vector<8x1xf32>
    %16 = math.rsqrt %15 : vector<8x1xf32>
    %17 = vector.broadcast %16 : vector<8x1xf32> to vector<8x256xf32>
    %18 = arith.mulf %8, %17 : vector<8x256xf32>
    %c0_7 = arith.constant 0 : index
    %c0_8 = arith.constant 0 : index
    %c0_9 = arith.constant 0 : index
    %19 = vector.load %arg2[%c0_7, %c0_8, %c0_9] : memref<3x1x256xf32, #tpu.memory_space<vmem>>, vector<1x1x256xf32>
    %20 = vector.shape_cast %19 : vector<1x1x256xf32> to vector<1x256xf32>
    %21 = vector.broadcast %20 : vector<1x256xf32> to vector<8x256xf32>
    %22 = arith.mulf %18, %21 : vector<8x256xf32>
    %c0_10 = arith.constant 0 : index
    %c0_11 = arith.constant 0 : index
    %c0_12 = arith.constant 0 : index
    %23 = vector.load %arg3[%c0_10, %c0_11, %c0_12] : memref<3x1x256xf32, #tpu.memory_space<vmem>>, vector<1x1x256xf32>
    %24 = vector.shape_cast %23 : vector<1x1x256xf32> to vector<1x256xf32>
    %25 = vector.broadcast %24 : vector<1x256xf32> to vector<8x256xf32>
    %26 = arith.addf %22, %25 : vector<8x256xf32>
    %27 = arith.truncf %26 : vector<8x256xf32> to vector<8x256xbf16>
    %c0_13 = arith.constant 0 : index
    %c0_14 = arith.constant 0 : index
    %c0_15 = arith.constant 0 : index
    %28 = vector.load %arg4[%c0_13, %c0_14, %c0_15] : memref<3x256x256xbf16, #tpu.memory_space<vmem>>, vector<1x256x256xbf16>
    %29 = vector.shape_cast %28 : vector<1x256x256xbf16> to vector<256x256xbf16>
    %cst_16 = arith.constant dense<0.000000e+00> : vector<8x256xf32>
    %30 = tpu.matmul %27, %29, %cst_16 {dimension_numbers = #tpu.dot_dimension_numbers<[1], [0], [0], [1], [0, 0, 1, 1], [], []>} : vector<8x256xbf16>, vector<256x256xbf16>, vector<8x256xf32> -> vector<8x256xf32>
    %c0_17 = arith.constant 0 : index
    %c0_18 = arith.constant 0 : index
    %c0_19 = arith.constant 0 : index
    %31 = vector.load %arg5[%c0_17, %c0_18, %c0_19] : memref<3x1x256xf32, #tpu.memory_space<vmem>>, vector<1x1x256xf32>
    %32 = vector.shape_cast %31 : vector<1x1x256xf32> to vector<1x256xf32>
    %33 = vector.broadcast %32 : vector<1x256xf32> to vector<8x256xf32>
    %34 = arith.addf %30, %33 : vector<8x256xf32>
    %cst_20 = arith.constant 5.000000e-01 : f32
    %35 = vector.broadcast %cst_20 : f32 to vector<8x256xf32>
    %36 = arith.mulf %35, %34 : vector<8x256xf32>
    %cst_21 = arith.constant 4.471500e-02 : f32
    %37 = vector.broadcast %cst_21 : f32 to vector<8x256xf32>
    %38 = arith.mulf %37, %34 : vector<8x256xf32>
    %39 = arith.mulf %38, %34 : vector<8x256xf32>
    %40 = arith.mulf %39, %34 : vector<8x256xf32>
    %41 = arith.addf %34, %40 : vector<8x256xf32>
    %cst_22 = arith.constant 0.797884583 : f32
    %42 = vector.broadcast %cst_22 : f32 to vector<8x256xf32>
    %43 = arith.mulf %42, %41 : vector<8x256xf32>
    %44 = math.tanh %43 : vector<8x256xf32>
    %cst_23 = arith.constant 1.000000e+00 : f32
    %45 = vector.broadcast %cst_23 : f32 to vector<8x256xf32>
    %46 = arith.addf %45, %44 : vector<8x256xf32>
    %47 = arith.mulf %36, %46 : vector<8x256xf32>
    %48 = arith.addf %47, %26 : vector<8x256xf32>
    %49 = arith.truncf %48 : vector<8x256xf32> to vector<8x256xbf16>
    %c0_24 = arith.constant 0 : index
    %c0_25 = arith.constant 0 : index
    %c0_26 = arith.constant 0 : index
    %50 = vector.load %arg6[%c0_24, %c0_25, %c0_26] : memref<3x256x256xbf16, #tpu.memory_space<vmem>>, vector<1x256x256xbf16>
    %51 = vector.shape_cast %50 : vector<1x256x256xbf16> to vector<256x256xbf16>
    %cst_27 = arith.constant dense<0.000000e+00> : vector<8x256xf32>
    %52 = tpu.matmul %49, %51, %cst_27 {dimension_numbers = #tpu.dot_dimension_numbers<[1], [0], [0], [1], [0, 0, 1, 1], [], []>} : vector<8x256xbf16>, vector<256x256xbf16>, vector<8x256xf32> -> vector<8x256xf32>
    %c0_28 = arith.constant 0 : index
    %c0_29 = arith.constant 0 : index
    %c0_30 = arith.constant 0 : index
    %53 = vector.load %arg7[%c0_28, %c0_29, %c0_30] : memref<3x1x256xf32, #tpu.memory_space<vmem>>, vector<1x1x256xf32>
    %54 = vector.shape_cast %53 : vector<1x1x256xf32> to vector<1x256xf32>
    %55 = vector.broadcast %54 : vector<1x256xf32> to vector<8x256xf32>
    %56 = arith.addf %52, %55 : vector<8x256xf32>
    %cst_31 = arith.constant 5.000000e-01 : f32
    %57 = vector.broadcast %cst_31 : f32 to vector<8x256xf32>
    %58 = arith.mulf %57, %56 : vector<8x256xf32>
    %cst_32 = arith.constant 4.471500e-02 : f32
    %59 = vector.broadcast %cst_32 : f32 to vector<8x256xf32>
    %60 = arith.mulf %59, %56 : vector<8x256xf32>
    %61 = arith.mulf %60, %56 : vector<8x256xf32>
    %62 = arith.mulf %61, %56 : vector<8x256xf32>
    %63 = arith.addf %56, %62 : vector<8x256xf32>
    %cst_33 = arith.constant 0.797884583 : f32
    %64 = vector.broadcast %cst_33 : f32 to vector<8x256xf32>
    %65 = arith.mulf %64, %63 : vector<8x256xf32>
    %66 = math.tanh %65 : vector<8x256xf32>
    %cst_34 = arith.constant 1.000000e+00 : f32
    %67 = vector.broadcast %cst_34 : f32 to vector<8x256xf32>
    %68 = arith.addf %67, %66 : vector<8x256xf32>
    %69 = arith.mulf %58, %68 : vector<8x256xf32>
    %70 = arith.addf %69, %48 : vector<8x256xf32>
    %71 = arith.truncf %70 : vector<8x256xf32> to vector<8x256xbf16>
    %c0_35 = arith.constant 0 : index
    %c0_36 = arith.constant 0 : index
    %c0_37 = arith.constant 0 : index
    %72 = vector.load %arg8[%c0_35, %c0_36, %c0_37] : memref<3x256x128xbf16, #tpu.memory_space<vmem>>, vector<1x256x128xbf16>
    %73 = vector.shape_cast %72 : vector<1x256x128xbf16> to vector<256x128xbf16>
    %cst_38 = arith.constant dense<0.000000e+00> : vector<8x128xf32>
    %74 = tpu.matmul %71, %73, %cst_38 {dimension_numbers = #tpu.dot_dimension_numbers<[1], [0], [0], [1], [0, 0, 1, 1], [], []>} : vector<8x256xbf16>, vector<256x128xbf16>, vector<8x128xf32> -> vector<8x128xf32>
    %c0_39 = arith.constant 0 : index
    %c0_40 = arith.constant 0 : index
    %c0_41 = arith.constant 0 : index
    %75 = vector.load %arg9[%c0_39, %c0_40, %c0_41] : memref<3x1x128xf32, #tpu.memory_space<vmem>>, vector<1x1x128xf32>
    %76 = vector.shape_cast %75 : vector<1x1x128xf32> to vector<1x128xf32>
    %77 = vector.broadcast %76 : vector<1x128xf32> to vector<8x128xf32>
    %78 = arith.addf %74, %77 : vector<8x128xf32>
    %c0_42 = arith.constant 0 : index
    %c0_43 = arith.constant 0 : index
    %c0_44 = arith.constant 0 : index
    %79 = vector.load %arg10[%c0_42, %c0_43, %c0_44] : memref<3x1x128xf32, #tpu.memory_space<vmem>>, vector<1x1x128xf32>
    %80 = vector.shape_cast %79 : vector<1x1x128xf32> to vector<1x128xf32>
    %81 = vector.broadcast %80 : vector<1x128xf32> to vector<8x128xf32>
    %82 = arith.mulf %78, %81 : vector<8x128xf32>
    %83 = arith.addf %0, %82 : vector<8x128xf32>
    %c1 = arith.constant 1 : index
    %c0_45 = arith.constant 0 : index
    %c0_46 = arith.constant 0 : index
    %84 = vector.load %arg1[%c1, %c0_45, %c0_46] : memref<3x8x256xf32, #tpu.memory_space<vmem>>, vector<1x8x256xf32>
    %85 = vector.shape_cast %84 : vector<1x8x256xf32> to vector<8x256xf32>
    %cst_47 = arith.constant dense<0.000000e+00> : vector<8xf32>
    %86 = vector.multi_reduction <add>, %85, %cst_47 [1] : vector<8x256xf32> to vector<8xf32>
    %87 = vector.shape_cast %86 : vector<8xf32> to vector<8x1xf32>
    %cst_48 = arith.constant 2.560000e+02 : f32
    %88 = vector.broadcast %cst_48 : f32 to vector<8x1xf32>
    %89 = arith.divf %87, %88 : vector<8x1xf32>
    %90 = vector.broadcast %89 : vector<8x1xf32> to vector<8x256xf32>
    %91 = arith.subf %85, %90 : vector<8x256xf32>
    %92 = arith.mulf %91, %91 : vector<8x256xf32>
    %cst_49 = arith.constant dense<0.000000e+00> : vector<8xf32>
    %93 = vector.multi_reduction <add>, %92, %cst_49 [1] : vector<8x256xf32> to vector<8xf32>
    %94 = vector.shape_cast %93 : vector<8xf32> to vector<8x1xf32>
    %cst_50 = arith.constant 2.560000e+02 : f32
    %95 = vector.broadcast %cst_50 : f32 to vector<8x1xf32>
    %96 = arith.divf %94, %95 : vector<8x1xf32>
    %cst_51 = arith.constant 9.99999974E-6 : f32
    %97 = vector.broadcast %cst_51 : f32 to vector<8x1xf32>
    %98 = arith.addf %96, %97 : vector<8x1xf32>
    %99 = math.rsqrt %98 : vector<8x1xf32>
    %100 = vector.broadcast %99 : vector<8x1xf32> to vector<8x256xf32>
    %101 = arith.mulf %91, %100 : vector<8x256xf32>
    %c1_52 = arith.constant 1 : index
    %c0_53 = arith.constant 0 : index
    %c0_54 = arith.constant 0 : index
    %102 = vector.load %arg2[%c1_52, %c0_53, %c0_54] : memref<3x1x256xf32, #tpu.memory_space<vmem>>, vector<1x1x256xf32>
    %103 = vector.shape_cast %102 : vector<1x1x256xf32> to vector<1x256xf32>
    %104 = vector.broadcast %103 : vector<1x256xf32> to vector<8x256xf32>
    %105 = arith.mulf %101, %104 : vector<8x256xf32>
    %c1_55 = arith.constant 1 : index
    %c0_56 = arith.constant 0 : index
    %c0_57 = arith.constant 0 : index
    %106 = vector.load %arg3[%c1_55, %c0_56, %c0_57] : memref<3x1x256xf32, #tpu.memory_space<vmem>>, vector<1x1x256xf32>
    %107 = vector.shape_cast %106 : vector<1x1x256xf32> to vector<1x256xf32>
    %108 = vector.broadcast %107 : vector<1x256xf32> to vector<8x256xf32>
    %109 = arith.addf %105, %108 : vector<8x256xf32>
    %110 = arith.truncf %109 : vector<8x256xf32> to vector<8x256xbf16>
    %c1_58 = arith.constant 1 : index
    %c0_59 = arith.constant 0 : index
    %c0_60 = arith.constant 0 : index
    %111 = vector.load %arg4[%c1_58, %c0_59, %c0_60] : memref<3x256x256xbf16, #tpu.memory_space<vmem>>, vector<1x256x256xbf16>
    %112 = vector.shape_cast %111 : vector<1x256x256xbf16> to vector<256x256xbf16>
    %cst_61 = arith.constant dense<0.000000e+00> : vector<8x256xf32>
    %113 = tpu.matmul %110, %112, %cst_61 {dimension_numbers = #tpu.dot_dimension_numbers<[1], [0], [0], [1], [0, 0, 1, 1], [], []>} : vector<8x256xbf16>, vector<256x256xbf16>, vector<8x256xf32> -> vector<8x256xf32>
    %c1_62 = arith.constant 1 : index
    %c0_63 = arith.constant 0 : index
    %c0_64 = arith.constant 0 : index
    %114 = vector.load %arg5[%c1_62, %c0_63, %c0_64] : memref<3x1x256xf32, #tpu.memory_space<vmem>>, vector<1x1x256xf32>
    %115 = vector.shape_cast %114 : vector<1x1x256xf32> to vector<1x256xf32>
    %116 = vector.broadcast %115 : vector<1x256xf32> to vector<8x256xf32>
    %117 = arith.addf %113, %116 : vector<8x256xf32>
    %cst_65 = arith.constant 5.000000e-01 : f32
    %118 = vector.broadcast %cst_65 : f32 to vector<8x256xf32>
    %119 = arith.mulf %118, %117 : vector<8x256xf32>
    %cst_66 = arith.constant 4.471500e-02 : f32
    %120 = vector.broadcast %cst_66 : f32 to vector<8x256xf32>
    %121 = arith.mulf %120, %117 : vector<8x256xf32>
    %122 = arith.mulf %121, %117 : vector<8x256xf32>
    %123 = arith.mulf %122, %117 : vector<8x256xf32>
    %124 = arith.addf %117, %123 : vector<8x256xf32>
    %cst_67 = arith.constant 0.797884583 : f32
    %125 = vector.broadcast %cst_67 : f32 to vector<8x256xf32>
    %126 = arith.mulf %125, %124 : vector<8x256xf32>
    %127 = math.tanh %126 : vector<8x256xf32>
    %cst_68 = arith.constant 1.000000e+00 : f32
    %128 = vector.broadcast %cst_68 : f32 to vector<8x256xf32>
    %129 = arith.addf %128, %127 : vector<8x256xf32>
    %130 = arith.mulf %119, %129 : vector<8x256xf32>
    %131 = arith.addf %130, %109 : vector<8x256xf32>
    %132 = arith.truncf %131 : vector<8x256xf32> to vector<8x256xbf16>
    %c1_69 = arith.constant 1 : index
    %c0_70 = arith.constant 0 : index
    %c0_71 = arith.constant 0 : index
    %133 = vector.load %arg6[%c1_69, %c0_70, %c0_71] : memref<3x256x256xbf16, #tpu.memory_space<vmem>>, vector<1x256x256xbf16>
    %134 = vector.shape_cast %133 : vector<1x256x256xbf16> to vector<256x256xbf16>
    %cst_72 = arith.constant dense<0.000000e+00> : vector<8x256xf32>
    %135 = tpu.matmul %132, %134, %cst_72 {dimension_numbers = #tpu.dot_dimension_numbers<[1], [0], [0], [1], [0, 0, 1, 1], [], []>} : vector<8x256xbf16>, vector<256x256xbf16>, vector<8x256xf32> -> vector<8x256xf32>
    %c1_73 = arith.constant 1 : index
    %c0_74 = arith.constant 0 : index
    %c0_75 = arith.constant 0 : index
    %136 = vector.load %arg7[%c1_73, %c0_74, %c0_75] : memref<3x1x256xf32, #tpu.memory_space<vmem>>, vector<1x1x256xf32>
    %137 = vector.shape_cast %136 : vector<1x1x256xf32> to vector<1x256xf32>
    %138 = vector.broadcast %137 : vector<1x256xf32> to vector<8x256xf32>
    %139 = arith.addf %135, %138 : vector<8x256xf32>
    %cst_76 = arith.constant 5.000000e-01 : f32
    %140 = vector.broadcast %cst_76 : f32 to vector<8x256xf32>
    %141 = arith.mulf %140, %139 : vector<8x256xf32>
    %cst_77 = arith.constant 4.471500e-02 : f32
    %142 = vector.broadcast %cst_77 : f32 to vector<8x256xf32>
    %143 = arith.mulf %142, %139 : vector<8x256xf32>
    %144 = arith.mulf %143, %139 : vector<8x256xf32>
    %145 = arith.mulf %144, %139 : vector<8x256xf32>
    %146 = arith.addf %139, %145 : vector<8x256xf32>
    %cst_78 = arith.constant 0.797884583 : f32
    %147 = vector.broadcast %cst_78 : f32 to vector<8x256xf32>
    %148 = arith.mulf %147, %146 : vector<8x256xf32>
    %149 = math.tanh %148 : vector<8x256xf32>
    %cst_79 = arith.constant 1.000000e+00 : f32
    %150 = vector.broadcast %cst_79 : f32 to vector<8x256xf32>
    %151 = arith.addf %150, %149 : vector<8x256xf32>
    %152 = arith.mulf %141, %151 : vector<8x256xf32>
    %153 = arith.addf %152, %131 : vector<8x256xf32>
    %154 = arith.truncf %153 : vector<8x256xf32> to vector<8x256xbf16>
    %c1_80 = arith.constant 1 : index
    %c0_81 = arith.constant 0 : index
    %c0_82 = arith.constant 0 : index
    %155 = vector.load %arg8[%c1_80, %c0_81, %c0_82] : memref<3x256x128xbf16, #tpu.memory_space<vmem>>, vector<1x256x128xbf16>
    %156 = vector.shape_cast %155 : vector<1x256x128xbf16> to vector<256x128xbf16>
    %cst_83 = arith.constant dense<0.000000e+00> : vector<8x128xf32>
    %157 = tpu.matmul %154, %156, %cst_83 {dimension_numbers = #tpu.dot_dimension_numbers<[1], [0], [0], [1], [0, 0, 1, 1], [], []>} : vector<8x256xbf16>, vector<256x128xbf16>, vector<8x128xf32> -> vector<8x128xf32>
    %c1_84 = arith.constant 1 : index
    %c0_85 = arith.constant 0 : index
    %c0_86 = arith.constant 0 : index
    %158 = vector.load %arg9[%c1_84, %c0_85, %c0_86] : memref<3x1x128xf32, #tpu.memory_space<vmem>>, vector<1x1x128xf32>
    %159 = vector.shape_cast %158 : vector<1x1x128xf32> to vector<1x128xf32>
    %160 = vector.broadcast %159 : vector<1x128xf32> to vector<8x128xf32>
    %161 = arith.addf %157, %160 : vector<8x128xf32>
    %c1_87 = arith.constant 1 : index
    %c0_88 = arith.constant 0 : index
    %c0_89 = arith.constant 0 : index
    %162 = vector.load %arg10[%c1_87, %c0_88, %c0_89] : memref<3x1x128xf32, #tpu.memory_space<vmem>>, vector<1x1x128xf32>
    %163 = vector.shape_cast %162 : vector<1x1x128xf32> to vector<1x128xf32>
    %164 = vector.broadcast %163 : vector<1x128xf32> to vector<8x128xf32>
    %165 = arith.mulf %161, %164 : vector<8x128xf32>
    %166 = arith.addf %83, %165 : vector<8x128xf32>
    %c2 = arith.constant 2 : index
    %c0_90 = arith.constant 0 : index
    %c0_91 = arith.constant 0 : index
    %167 = vector.load %arg1[%c2, %c0_90, %c0_91] : memref<3x8x256xf32, #tpu.memory_space<vmem>>, vector<1x8x256xf32>
    %168 = vector.shape_cast %167 : vector<1x8x256xf32> to vector<8x256xf32>
    %cst_92 = arith.constant dense<0.000000e+00> : vector<8xf32>
    %169 = vector.multi_reduction <add>, %168, %cst_92 [1] : vector<8x256xf32> to vector<8xf32>
    %170 = vector.shape_cast %169 : vector<8xf32> to vector<8x1xf32>
    %cst_93 = arith.constant 2.560000e+02 : f32
    %171 = vector.broadcast %cst_93 : f32 to vector<8x1xf32>
    %172 = arith.divf %170, %171 : vector<8x1xf32>
    %173 = vector.broadcast %172 : vector<8x1xf32> to vector<8x256xf32>
    %174 = arith.subf %168, %173 : vector<8x256xf32>
    %175 = arith.mulf %174, %174 : vector<8x256xf32>
    %cst_94 = arith.constant dense<0.000000e+00> : vector<8xf32>
    %176 = vector.multi_reduction <add>, %175, %cst_94 [1] : vector<8x256xf32> to vector<8xf32>
    %177 = vector.shape_cast %176 : vector<8xf32> to vector<8x1xf32>
    %cst_95 = arith.constant 2.560000e+02 : f32
    %178 = vector.broadcast %cst_95 : f32 to vector<8x1xf32>
    %179 = arith.divf %177, %178 : vector<8x1xf32>
    %cst_96 = arith.constant 9.99999974E-6 : f32
    %180 = vector.broadcast %cst_96 : f32 to vector<8x1xf32>
    %181 = arith.addf %179, %180 : vector<8x1xf32>
    %182 = math.rsqrt %181 : vector<8x1xf32>
    %183 = vector.broadcast %182 : vector<8x1xf32> to vector<8x256xf32>
    %184 = arith.mulf %174, %183 : vector<8x256xf32>
    %c2_97 = arith.constant 2 : index
    %c0_98 = arith.constant 0 : index
    %c0_99 = arith.constant 0 : index
    %185 = vector.load %arg2[%c2_97, %c0_98, %c0_99] : memref<3x1x256xf32, #tpu.memory_space<vmem>>, vector<1x1x256xf32>
    %186 = vector.shape_cast %185 : vector<1x1x256xf32> to vector<1x256xf32>
    %187 = vector.broadcast %186 : vector<1x256xf32> to vector<8x256xf32>
    %188 = arith.mulf %184, %187 : vector<8x256xf32>
    %c2_100 = arith.constant 2 : index
    %c0_101 = arith.constant 0 : index
    %c0_102 = arith.constant 0 : index
    %189 = vector.load %arg3[%c2_100, %c0_101, %c0_102] : memref<3x1x256xf32, #tpu.memory_space<vmem>>, vector<1x1x256xf32>
    %190 = vector.shape_cast %189 : vector<1x1x256xf32> to vector<1x256xf32>
    %191 = vector.broadcast %190 : vector<1x256xf32> to vector<8x256xf32>
    %192 = arith.addf %188, %191 : vector<8x256xf32>
    %193 = arith.truncf %192 : vector<8x256xf32> to vector<8x256xbf16>
    %c2_103 = arith.constant 2 : index
    %c0_104 = arith.constant 0 : index
    %c0_105 = arith.constant 0 : index
    %194 = vector.load %arg4[%c2_103, %c0_104, %c0_105] : memref<3x256x256xbf16, #tpu.memory_space<vmem>>, vector<1x256x256xbf16>
    %195 = vector.shape_cast %194 : vector<1x256x256xbf16> to vector<256x256xbf16>
    %cst_106 = arith.constant dense<0.000000e+00> : vector<8x256xf32>
    %196 = tpu.matmul %193, %195, %cst_106 {dimension_numbers = #tpu.dot_dimension_numbers<[1], [0], [0], [1], [0, 0, 1, 1], [], []>} : vector<8x256xbf16>, vector<256x256xbf16>, vector<8x256xf32> -> vector<8x256xf32>
    %c2_107 = arith.constant 2 : index
    %c0_108 = arith.constant 0 : index
    %c0_109 = arith.constant 0 : index
    %197 = vector.load %arg5[%c2_107, %c0_108, %c0_109] : memref<3x1x256xf32, #tpu.memory_space<vmem>>, vector<1x1x256xf32>
    %198 = vector.shape_cast %197 : vector<1x1x256xf32> to vector<1x256xf32>
    %199 = vector.broadcast %198 : vector<1x256xf32> to vector<8x256xf32>
    %200 = arith.addf %196, %199 : vector<8x256xf32>
    %cst_110 = arith.constant 5.000000e-01 : f32
    %201 = vector.broadcast %cst_110 : f32 to vector<8x256xf32>
    %202 = arith.mulf %201, %200 : vector<8x256xf32>
    %cst_111 = arith.constant 4.471500e-02 : f32
    %203 = vector.broadcast %cst_111 : f32 to vector<8x256xf32>
    %204 = arith.mulf %203, %200 : vector<8x256xf32>
    %205 = arith.mulf %204, %200 : vector<8x256xf32>
    %206 = arith.mulf %205, %200 : vector<8x256xf32>
    %207 = arith.addf %200, %206 : vector<8x256xf32>
    %cst_112 = arith.constant 0.797884583 : f32
    %208 = vector.broadcast %cst_112 : f32 to vector<8x256xf32>
    %209 = arith.mulf %208, %207 : vector<8x256xf32>
    %210 = math.tanh %209 : vector<8x256xf32>
    %cst_113 = arith.constant 1.000000e+00 : f32
    %211 = vector.broadcast %cst_113 : f32 to vector<8x256xf32>
    %212 = arith.addf %211, %210 : vector<8x256xf32>
    %213 = arith.mulf %202, %212 : vector<8x256xf32>
    %214 = arith.addf %213, %192 : vector<8x256xf32>
    %215 = arith.truncf %214 : vector<8x256xf32> to vector<8x256xbf16>
    %c2_114 = arith.constant 2 : index
    %c0_115 = arith.constant 0 : index
    %c0_116 = arith.constant 0 : index
    %216 = vector.load %arg6[%c2_114, %c0_115, %c0_116] : memref<3x256x256xbf16, #tpu.memory_space<vmem>>, vector<1x256x256xbf16>
    %217 = vector.shape_cast %216 : vector<1x256x256xbf16> to vector<256x256xbf16>
    %cst_117 = arith.constant dense<0.000000e+00> : vector<8x256xf32>
    %218 = tpu.matmul %215, %217, %cst_117 {dimension_numbers = #tpu.dot_dimension_numbers<[1], [0], [0], [1], [0, 0, 1, 1], [], []>} : vector<8x256xbf16>, vector<256x256xbf16>, vector<8x256xf32> -> vector<8x256xf32>
    %c2_118 = arith.constant 2 : index
    %c0_119 = arith.constant 0 : index
    %c0_120 = arith.constant 0 : index
    %219 = vector.load %arg7[%c2_118, %c0_119, %c0_120] : memref<3x1x256xf32, #tpu.memory_space<vmem>>, vector<1x1x256xf32>
    %220 = vector.shape_cast %219 : vector<1x1x256xf32> to vector<1x256xf32>
    %221 = vector.broadcast %220 : vector<1x256xf32> to vector<8x256xf32>
    %222 = arith.addf %218, %221 : vector<8x256xf32>
    %cst_121 = arith.constant 5.000000e-01 : f32
    %223 = vector.broadcast %cst_121 : f32 to vector<8x256xf32>
    %224 = arith.mulf %223, %222 : vector<8x256xf32>
    %cst_122 = arith.constant 4.471500e-02 : f32
    %225 = vector.broadcast %cst_122 : f32 to vector<8x256xf32>
    %226 = arith.mulf %225, %222 : vector<8x256xf32>
    %227 = arith.mulf %226, %222 : vector<8x256xf32>
    %228 = arith.mulf %227, %222 : vector<8x256xf32>
    %229 = arith.addf %222, %228 : vector<8x256xf32>
    %cst_123 = arith.constant 0.797884583 : f32
    %230 = vector.broadcast %cst_123 : f32 to vector<8x256xf32>
    %231 = arith.mulf %230, %229 : vector<8x256xf32>
    %232 = math.tanh %231 : vector<8x256xf32>
    %cst_124 = arith.constant 1.000000e+00 : f32
    %233 = vector.broadcast %cst_124 : f32 to vector<8x256xf32>
    %234 = arith.addf %233, %232 : vector<8x256xf32>
    %235 = arith.mulf %224, %234 : vector<8x256xf32>
    %236 = arith.addf %235, %214 : vector<8x256xf32>
    %237 = arith.truncf %236 : vector<8x256xf32> to vector<8x256xbf16>
    %c2_125 = arith.constant 2 : index
    %c0_126 = arith.constant 0 : index
    %c0_127 = arith.constant 0 : index
    %238 = vector.load %arg8[%c2_125, %c0_126, %c0_127] : memref<3x256x128xbf16, #tpu.memory_space<vmem>>, vector<1x256x128xbf16>
    %239 = vector.shape_cast %238 : vector<1x256x128xbf16> to vector<256x128xbf16>
    %cst_128 = arith.constant dense<0.000000e+00> : vector<8x128xf32>
    %240 = tpu.matmul %237, %239, %cst_128 {dimension_numbers = #tpu.dot_dimension_numbers<[1], [0], [0], [1], [0, 0, 1, 1], [], []>} : vector<8x256xbf16>, vector<256x128xbf16>, vector<8x128xf32> -> vector<8x128xf32>
    %c2_129 = arith.constant 2 : index
    %c0_130 = arith.constant 0 : index
    %c0_131 = arith.constant 0 : index
    %241 = vector.load %arg9[%c2_129, %c0_130, %c0_131] : memref<3x1x128xf32, #tpu.memory_space<vmem>>, vector<1x1x128xf32>
    %242 = vector.shape_cast %241 : vector<1x1x128xf32> to vector<1x128xf32>
    %243 = vector.broadcast %242 : vector<1x128xf32> to vector<8x128xf32>
    %244 = arith.addf %240, %243 : vector<8x128xf32>
    %c2_132 = arith.constant 2 : index
    %c0_133 = arith.constant 0 : index
    %c0_134 = arith.constant 0 : index
    %245 = vector.load %arg10[%c2_132, %c0_133, %c0_134] : memref<3x1x128xf32, #tpu.memory_space<vmem>>, vector<1x1x128xf32>
    %246 = vector.shape_cast %245 : vector<1x1x128xf32> to vector<1x128xf32>
    %247 = vector.broadcast %246 : vector<1x128xf32> to vector<8x128xf32>
    %248 = arith.mulf %244, %247 : vector<8x128xf32>
    %249 = arith.addf %166, %248 : vector<8x128xf32>
    %c0_135 = arith.constant 0 : index
    %c0_136 = arith.constant 0 : index
    %250 = vector.load %arg11[%c0_135, %c0_136] : memref<8x128xf32, #tpu.memory_space<vmem>>, vector<8x128xf32>
    tpu.vector_store %arg11[%c0_135, %c0_136], %249 {strides = array<i32>} : memref<8x128xf32, #tpu.memory_space<vmem>>, vector<8x128xf32>,
    return
  }
  func.func @transform_0(%arg0: i32) -> (i32, i32, i32) {
    %c0_i32 = arith.constant 0 : i32
    %c0_i32_0 = arith.constant 0 : i32
    %c0_i32_1 = arith.constant 0 : i32
    return %c0_i32, %arg0, %c0_i32_0 : i32, i32, i32
  }
  func.func @transform_1(%arg0: i32) -> (i32, i32, i32) {
    %c0_i32 = arith.constant 0 : i32
    %c0_i32_0 = arith.constant 0 : i32
    %c0_i32_1 = arith.constant 0 : i32
    %c0_i32_2 = arith.constant 0 : i32
    return %c0_i32, %c0_i32_0, %c0_i32_1 : i32, i32, i32
  }
  func.func @transform_2(%arg0: i32) -> (i32, i32, i32) {
    %c0_i32 = arith.constant 0 : i32
    %c0_i32_0 = arith.constant 0 : i32
    %c0_i32_1 = arith.constant 0 : i32
    %c0_i32_2 = arith.constant 0 : i32
    return %c0_i32, %c0_i32_0, %c0_i32_1 : i32, i32, i32
  }
  func.func @transform_3(%arg0: i32) -> (i32, i32, i32) {
    %c0_i32 = arith.constant 0 : i32
    %c0_i32_0 = arith.constant 0 : i32
    %c0_i32_1 = arith.constant 0 : i32
    %c0_i32_2 = arith.constant 0 : i32
    return %c0_i32, %c0_i32_0, %c0_i32_1 : i32, i32, i32
  }
  func.func @transform_4(%arg0: i32) -> (i32, i32, i32) {
    %c0_i32 = arith.constant 0 : i32
    %c0_i32_0 = arith.constant 0 : i32
    %c0_i32_1 = arith.constant 0 : i32
    %c0_i32_2 = arith.constant 0 : i32
    return %c0_i32, %c0_i32_0, %c0_i32_1 : i32, i32, i32
  }
  func.func @transform_5(%arg0: i32) -> (i32, i32, i32) {
    %c0_i32 = arith.constant 0 : i32
    %c0_i32_0 = arith.constant 0 : i32
    %c0_i32_1 = arith.constant 0 : i32
    %c0_i32_2 = arith.constant 0 : i32
    return %c0_i32, %c0_i32_0, %c0_i32_1 : i32, i32, i32
  }
  func.func @transform_6(%arg0: i32) -> (i32, i32, i32) {
    %c0_i32 = arith.constant 0 : i32
    %c0_i32_0 = arith.constant 0 : i32
    %c0_i32_1 = arith.constant 0 : i32
    %c0_i32_2 = arith.constant 0 : i32
    return %c0_i32, %c0_i32_0, %c0_i32_1 : i32, i32, i32
  }
  func.func @transform_7(%arg0: i32) -> (i32, i32, i32) {
    %c0_i32 = arith.constant 0 : i32
    %c0_i32_0 = arith.constant 0 : i32
    %c0_i32_1 = arith.constant 0 : i32
    %c0_i32_2 = arith.constant 0 : i32
    return %c0_i32, %c0_i32_0, %c0_i32_1 : i32, i32, i32
  }
  func.func @transform_8(%arg0: i32) -> (i32, i32, i32) {
    %c0_i32 = arith.constant 0 : i32
    %c0_i32_0 = arith.constant 0 : i32
    %c0_i32_1 = arith.constant 0 : i32
    %c0_i32_2 = arith.constant 0 : i32
    return %c0_i32, %c0_i32_0, %c0_i32_1 : i32, i32, i32
  }
  func.func @transform_9(%arg0: i32) -> (i32, i32, i32) {
    %c0_i32 = arith.constant 0 : i32
    %c0_i32_0 = arith.constant 0 : i32
    %c0_i32_1 = arith.constant 0 : i32
    %c0_i32_2 = arith.constant 0 : i32
    return %c0_i32, %c0_i32_0, %c0_i32_1 : i32, i32, i32
  }
  func.func @transform_10(%arg0: i32) -> (i32, i32) {
    %c0_i32 = arith.constant 0 : i32
    %c0_i32_0 = arith.constant 0 : i32
    return %arg0, %c0_i32 : i32, i32
  }
}

</mosaic_0001>

<llo_original>
// kernel: tpu_custom_call.1
$region0: #{tpu_custom_call.1}
  #allocation0 [shape = 'u32[]', space=smem, size = 0x4, offset = 0x4, fixed_abs, tag = 'smem constant byte address 0x4 - core index']
  #allocation1 [shape = 'u32[144,128]{1,0:T(1,128)}', space=vmem, size = 0x12000, scoped, tag = 'internal scratch']
  %s0 = inlined_call_operand.hbm [shape: f32[3,8,256], index: 0, kind: input, shape index: {}]
  %s1 = inlined_call_operand.hbm [shape: f32[3,1,256], index: 1, kind: input, shape index: {}]
  %s2 = inlined_call_operand.hbm [shape: f32[3,1,256], index: 2, kind: input, shape index: {}]
  %s3 = inlined_call_operand.hbm [shape: bf16[3,256,256], index: 3, kind: input, shape index: {}]
  %s4 = inlined_call_operand.vmem [shape: f32[3,1,256], index: 4, kind: input, shape index: {}]
  %s5 = inlined_call_operand.hbm [shape: bf16[3,256,256], index: 5, kind: input, shape index: {}]
  %s6 = inlined_call_operand.hbm [shape: f32[3,1,256], index: 6, kind: input, shape index: {}]
  %s7 = inlined_call_operand.hbm [shape: bf16[3,256,128], index: 7, kind: input, shape index: {}]
  %s8 = inlined_call_operand.vmem [shape: f32[3,1,128], index: 8, kind: input, shape index: {}]
  %s9 = inlined_call_operand.vmem [shape: f32[3,1,128], index: 9, kind: input, shape index: {}]
  %s10 = inlined_call_operand.hbm [shape: f32[8,128], index: 10, kind: output, shape index: {}]
  %s11 = sld [smem:[#allocation0]]
  $region78: #{tpu_custom_call.1} parent=0
    _
  %s13 = ssub.s32 1, %s11
  %s14 = scalar_select 0, %s13, %s11
  $region1: #{tpu_custom_call.1} parent=0
    #allocation2 [shape = 'u8[24576]{0}', space=vmem, size = 0x6000, scoped, tag = 'input window, operand 0, single buffered']
    #allocation3 [shape = 's32[1]{0}', space=sflag, size = 0x4, scoped, tag = 'scoped memory for tpu_custom_call.1']
    #allocation4 [shape = 's32[1]{0}', space=sflag, size = 0x4, scoped, tag = 'scoped memory for tpu_custom_call.1']
    #allocation5 [shape = 'u8[3072]{0}', space=vmem, size = 0xc00, scoped, tag = 'input window, operand 1, single buffered']
    #allocation6 [shape = 's32[1]{0}', space=sflag, size = 0x4, scoped, tag = 'scoped memory for tpu_custom_call.1']
    #allocation7 [shape = 'u8[3072]{0}', space=vmem, size = 0xc00, scoped, tag = 'input window, operand 2, single buffered']
    #allocation8 [shape = 'u8[393216]{0}', space=vmem, size = 0x60000, scoped, tag = 'input window, operand 3, single buffered']
    #allocation9 [shape = 's32[1]{0}', space=sflag, size = 0x4, scoped, tag = 'scoped memory for tpu_custom_call.1']
    #allocation10 [shape = 'u8[393216]{0}', space=vmem, size = 0x60000, scoped, tag = 'input window, operand 5, single buffered']
    #allocation11 [shape = 'u8[3072]{0}', space=vmem, size = 0xc00, scoped, tag = 'input window, operand 6, single buffered']
    #allocation12 [shape = 's32[1]{0}', space=sflag, size = 0x4, scoped, tag = 'scoped memory for tpu_custom_call.1']
    #allocation13 [shape = 'u8[196608]{0}', space=vmem, size = 0x30000, scoped, tag = 'input window, operand 7, single buffered']
    #allocation14 [shape = 'u8[4096]{0}', space=vmem, size = 0x1000, scoped, tag = 'output window, operand 0, single buffered']
    %15 = vsyncpa [#allocation3], 0
    %16 = vsyncpa [#allocation6], 0
    %17 = vsyncpa [#allocation9], 0
    %18 = vsyncpa [#allocation12], 0
    %19 = vsyncpa [#allocation4], 0
    // Predicated region
    $region2: #{tpu_custom_call.1} parent=1 // pred_check
      _
    $region3: #{tpu_custom_call.1} parent=1 // pred_check_branch
      %21 = sbr.rel (0) target = $region5
    $region4: #{tpu_custom_call.1} parent=1 // pred_region
      %s23 = ssub.s32 768, 768
      %24 = vsyncadd [#allocation3], %s23
      %s25 = sshll.u32 [#allocation2], 4
      %s26 = int_to_ptr.vmem [resolvable:$true] %s25
      %31 = dma.hbm_to_vmem [thread:$0]  %s0, 768, %s26, [#allocation3], 256, 256, 16
    $region5: #{tpu_custom_call.1} parent=1 // pred_fallthru
      _
    // Predicated region
    $region6: #{tpu_custom_call.1} parent=1 // pred_check
      _
    $region7: #{tpu_custom_call.1} parent=1 // pred_check_branch
      %33 = sbr.rel (0) target = $region9
    $region8: #{tpu_custom_call.1} parent=1 // pred_region
      %s35 = ssub.s32 96, 96
      %36 = vsyncadd [#allocation6], %s35
      %s37 = sshll.u32 [#allocation5], 4
      %s38 = int_to_ptr.vmem [resolvable:$true] %s37
      %43 = dma.hbm_to_vmem [thread:$0]  %s1, 96, %s38, [#allocation6], 32, 32, 2
    $region9: #{tpu_custom_call.1} parent=1 // pred_fallthru
      _
    // Predicated region
    $region10: #{tpu_custom_call.1} parent=1 // pred_check
      _
    $region11: #{tpu_custom_call.1} parent=1 // pred_check_branch
      %45 = sbr.rel (0) target = $region13
    $region12: #{tpu_custom_call.1} parent=1 // pred_region
      %s47 = ssub.s32 96, 96
      %48 = vsyncadd [#allocation6], %s47
      %s49 = sshll.u32 [#allocation7], 4
      %s50 = int_to_ptr.vmem [resolvable:$true] %s49
      %55 = dma.hbm_to_vmem [thread:$0]  %s2, 96, %s50, [#allocation6], 32, 32, 2
    $region13: #{tpu_custom_call.1} parent=1 // pred_fallthru
      _
    // Predicated region
    $region14: #{tpu_custom_call.1} parent=1 // pred_check
      _
    $region15: #{tpu_custom_call.1} parent=1 // pred_check_branch
      %57 = sbr.rel (0) target = $region17
    $region16: #{tpu_custom_call.1} parent=1 // pred_region
      %s59 = ssub.s32 12288, 12288
      %60 = vsyncadd [#allocation9], %s59
      %s61 = sshll.u32 [#allocation8], 4
      %s62 = int_to_ptr.vmem [resolvable:$true] %s61
      %67 = dma.hbm_to_vmem [thread:$0]  %s3, 12288, %s62, [#allocation9], 128, 128, 8
    $region17: #{tpu_custom_call.1} parent=1 // pred_fallthru
      _
    // Predicated region
    $region18: #{tpu_custom_call.1} parent=1 // pred_check
      _
    $region19: #{tpu_custom_call.1} parent=1 // pred_check_branch
      %69 = sbr.rel (0) target = $region21
    $region20: #{tpu_custom_call.1} parent=1 // pred_region
      _
    $region21: #{tpu_custom_call.1} parent=1 // pred_fallthru
      _
    // Predicated region
    $region22: #{tpu_custom_call.1} parent=1 // pred_check
      _
    $region23: #{tpu_custom_call.1} parent=1 // pred_check_branch
      %71 = sbr.rel (0) target = $region25
    $region24: #{tpu_custom_call.1} parent=1 // pred_region
      %s73 = ssub.s32 12288, 12288
      %74 = vsyncadd [#allocation9], %s73
      %s75 = sshll.u32 [#allocation10], 4
      %s76 = int_to_ptr.vmem [resolvable:$true] %s75
      %81 = dma.hbm_to_vmem [thread:$0]  %s5, 12288, %s76, [#allocation9], 128, 128, 8
    $region25: #{tpu_custom_call.1} parent=1 // pred_fallthru
      _
    // Predicated region
    $region26: #{tpu_custom_call.1} parent=1 // pred_check
      _
    $region27: #{tpu_custom_call.1} parent=1 // pred_check_branch
      %83 = sbr.rel (0) target = $region29
    $region28: #{tpu_custom_call.1} parent=1 // pred_region
      %s85 = ssub.s32 96, 96
      %86 = vsyncadd [#allocation12], %s85
      %s87 = sshll.u32 [#allocation11], 4
      %s88 = int_to_ptr.vmem [resolvable:$true] %s87
      %93 = dma.hbm_to_vmem [thread:$0]  %s6, 96, %s88, [#allocation12], 32, 32, 2
    $region29: #{tpu_custom_call.1} parent=1 // pred_fallthru
      _
    // Predicated region
    $region30: #{tpu_custom_call.1} parent=1 // pred_check
      _
    $region31: #{tpu_custom_call.1} parent=1 // pred_check_branch
      %95 = sbr.rel (0) target = $region33
    $region32: #{tpu_custom_call.1} parent=1 // pred_region
      %s97 = ssub.s32 6144, 6144
      %98 = vsyncadd [#allocation12], %s97
      %s99 = sshll.u32 [#allocation13], 4
      %s100 = int_to_ptr.vmem [resolvable:$true] %s99
      %105 = dma.hbm_to_vmem [thread:$0]  %s7, 6144, %s100, [#allocation12], 64, 64, 4
    $region33: #{tpu_custom_call.1} parent=1 // pred_fallthru
      _
    // Predicated region
    $region34: #{tpu_custom_call.1} parent=1 // pred_check
      _
    $region35: #{tpu_custom_call.1} parent=1 // pred_check_branch
      %107 = sbr.rel (0) target = $region37
    $region36: #{tpu_custom_call.1} parent=1 // pred_region
      _
    $region37: #{tpu_custom_call.1} parent=1 // pred_fallthru
      _
    // Predicated region
    $region38: #{tpu_custom_call.1} parent=1 // pred_check
      _
    $region39: #{tpu_custom_call.1} parent=1 // pred_check_branch
      %109 = sbr.rel (0) target = $region41
    $region40: #{tpu_custom_call.1} parent=1 // pred_region
      _
    $region41: #{tpu_custom_call.1} parent=1 // pred_fallthru
      _
    // Predicated region
    $region42: #{tpu_custom_call.1} parent=1 // pred_check
      _
    $region43: #{tpu_custom_call.1} parent=1 // pred_check_branch
      %111 = sbr.rel (0) target = $region45
    $region44: #{tpu_custom_call.1} parent=1 // pred_region
      %112 = dma.done [#allocation3], 768
    $region45: #{tpu_custom_call.1} parent=1 // pred_fallthru
      _
    // Predicated region
    $region46: #{tpu_custom_call.1} parent=1 // pred_check
      _
    $region47: #{tpu_custom_call.1} parent=1 // pred_check_branch
      %114 = sbr.rel (0) target = $region49
    $region48: #{tpu_custom_call.1} parent=1 // pred_region
      %115 = dma.done [#allocation6], 96
    $region49: #{tpu_custom_call.1} parent=1 // pred_fallthru
      _
    // Predicated region
    $region50: #{tpu_custom_call.1} parent=1 // pred_check
      _
    $region51: #{tpu_custom_call.1} parent=1 // pred_check_branch
      %117 = sbr.rel (0) target = $region53
    $region52: #{tpu_custom_call.1} parent=1 // pred_region
      %118 = dma.done [#allocation6], 96
    $region53: #{tpu_custom_call.1} parent=1 // pred_fallthru
      _
    // Predicated region
    $region54: #{tpu_custom_call.1} parent=1 // pred_check
      _
    $region55: #{tpu_custom_call.1} parent=1 // pred_check_branch
      %120 = sbr.rel (0) target = $region57
    $region56: #{tpu_custom_call.1} parent=1 // pred_region
      %121 = dma.done [#allocation9], 12288
    $region57: #{tpu_custom_call.1} parent=1 // pred_fallthru
      _
    // Predicated region
    $region58: #{tpu_custom_call.1} parent=1 // pred_check
      _
    $region59: #{tpu_custom_call.1} parent=1 // pred_check_branch
      %123 = sbr.rel (0) target = $region61
    $region60: #{tpu_custom_call.1} parent=1 // pred_region
      %124 = dma.done [#allocation9], 12288
    $region61: #{tpu_custom_call.1} parent=1 // pred_fallthru
      _
    // Predicated region
    $region62: #{tpu_custom_call.1} parent=1 // pred_check
      _
    $region63: #{tpu_custom_call.1} parent=1 // pred_check_branch
      %126 = sbr.rel (0) target = $region65
    $region64: #{tpu_custom_call.1} parent=1 // pred_region
      %127 = dma.done [#allocation12], 96
    $region65: #{tpu_custom_call.1} parent=1 // pred_fallthru
      _
    // Predicated region
    $region66: #{tpu_custom_call.1} parent=1 // pred_check
      _
    $region67: #{tpu_custom_call.1} parent=1 // pred_check_branch
      %129 = sbr.rel (0) target = $region69
    $region68: #{tpu_custom_call.1} parent=1 // pred_region
      %130 = dma.done [#allocation12], 6144
    $region69: #{tpu_custom_call.1} parent=1 // pred_fallthru
      _
    %v132 = vld [vmem:[#allocation2] sm:$0xff]
    %v133 = vld [vmem:[#allocation2 + $0x8] sm:$0xff]
    %v134 = vadd.f32 %v132, %v133
    %135 = vadd.xlane.f32.xlu0 %v134
    %v136 = vpop.xlane.xlu0 %135
    %v137 = vrcp.pop 256.0
    %v138 = vmul.f32 %v136, %v137
    %v139 = vsub.f32 %v132, %v138
    %v140 = vsub.f32 %v133, %v138
    %v141 = vmul.f32 %v139, %v139
    %v142 = vmul.f32 %v140, %v140
    %v143 = vadd.f32 %v141, %v142
    %144 = vadd.xlane.f32.xlu0 %v143
    %v145 = vpop.xlane.xlu0 %144
    %v146 = vmul.f32 %v145, %v137
    %v147 = vadd.f32 %v146, 1e-05
    %v148 = vrsqrt.pop %v147
    %v149 = vmul.f32 %v139, %v148
    %v150 = vmul.f32 %v140, %v148
    %v151 = vld [vmem:[#allocation5] sm:$0x3]
    %v153 = vlaneseq
    %v154 = vshrl.u32 %v153, 7
    %v155 = vsub.s32 0, %v154
    %v156 = vrot.slane %v151, %v155
    %v157 = vlaneseq
    %v158 = vshrl.u32 %v157, 7
    %v159 = vsub.s32 1, %v158
    %v160 = vrot.slane %v151, %v159
    %v163 = vmul.f32 %v149, %v156
    %v164 = vmul.f32 %v150, %v160
    %v165 = vld [vmem:[#allocation7] sm:$0x3]
    %v167 = vlaneseq
    %v168 = vshrl.u32 %v167, 7
    %v169 = vsub.s32 0, %v168
    %v170 = vrot.slane %v165, %v169
    %v171 = vlaneseq
    %v172 = vshrl.u32 %v171, 7
    %v173 = vsub.s32 1, %v172
    %v174 = vrot.slane %v165, %v173
    %v177 = vadd.f32 %v163, %v170
    %v178 = vadd.f32 %v164, %v174
    %v179 = vpack.c.bf16 %v177, %v177
    %v180 = vpack.c.bf16 %v178, %v178
    %v181 = vld [vmem:[#allocation8] sm:$0xff]
    %v182 = vld [vmem:[#allocation8 + $0x8] sm:$0xff]
    %v183 = vld [vmem:[#allocation8 + $0x10] sm:$0xff]
    %v184 = vld [vmem:[#allocation8 + $0x18] sm:$0xff]
    %v185 = vld [vmem:[#allocation8 + $0x20] sm:$0xff]
    %v186 = vld [vmem:[#allocation8 + $0x28] sm:$0xff]
    %v187 = vld [vmem:[#allocation8 + $0x30] sm:$0xff]
    %v188 = vld [vmem:[#allocation8 + $0x38] sm:$0xff]
    %v189 = vld [vmem:[#allocation8 + $0x40] sm:$0xff]
    %v190 = vld [vmem:[#allocation8 + $0x48] sm:$0xff]
    %v191 = vld [vmem:[#allocation8 + $0x50] sm:$0xff]
    %v192 = vld [vmem:[#allocation8 + $0x58] sm:$0xff]
    %v193 = vld [vmem:[#allocation8 + $0x60] sm:$0xff]
    %v194 = vld [vmem:[#allocation8 + $0x68] sm:$0xff]
    %v195 = vld [vmem:[#allocation8 + $0x70] sm:$0xff]
    %v196 = vld [vmem:[#allocation8 + $0x78] sm:$0xff]
    %v197 = vld [vmem:[#allocation8 + $0x80] sm:$0xff]
    %v198 = vld [vmem:[#allocation8 + $0x88] sm:$0xff]
    %v199 = vld [vmem:[#allocation8 + $0x90] sm:$0xff]
    %v200 = vld [vmem:[#allocation8 + $0x98] sm:$0xff]
    %v201 = vld [vmem:[#allocation8 + $0xa0] sm:$0xff]
    %v202 = vld [vmem:[#allocation8 + $0xa8] sm:$0xff]
    %v203 = vld [vmem:[#allocation8 + $0xb0] sm:$0xff]
    %v204 = vld [vmem:[#allocation8 + $0xb8] sm:$0xff]
    %v205 = vld [vmem:[#allocation8 + $0xc0] sm:$0xff]
    %v206 = vld [vmem:[#allocation8 + $0xc8] sm:$0xff]
    %v207 = vld [vmem:[#allocation8 + $0xd0] sm:$0xff]
    %v208 = vld [vmem:[#allocation8 + $0xd8] sm:$0xff]
    %v209 = vld [vmem:[#allocation8 + $0xe0] sm:$0xff]
    %v210 = vld [vmem:[#allocation8 + $0xe8] sm:$0xff]
    %v211 = vld [vmem:[#allocation8 + $0xf0] sm:$0xff]
    %v212 = vld [vmem:[#allocation8 + $0xf8] sm:$0xff]
    %v213 = vld [vmem:[%s4] sm:$0x3]
    %v215 = vlaneseq
    %v216 = vshrl.u32 %v215, 7
    %v217 = vsub.s32 0, %v216
    %v218 = vrot.slane %v213, %v217
    %v219 = vlaneseq
    %v220 = vshrl.u32 %v219, 7
    %v221 = vsub.s32 1, %v220
    %v222 = vrot.slane %v213, %v221
    %v257 = vunpack.c.l.b16 %v181
    %v258 = vunpack.c.h.b16 %v181
    %v259 = vunpack.c.l.b16 %v182
    %v260 = vunpack.c.h.b16 %v182
    %v261 = vunpack.c.l.b16 %v183
    %v262 = vunpack.c.h.b16 %v183
    %v263 = vunpack.c.l.b16 %v184
    %v264 = vunpack.c.h.b16 %v184
    %v265 = vunpack.c.l.b16 %v185
    %v266 = vunpack.c.h.b16 %v185
    %v267 = vunpack.c.l.b16 %v186
    %v268 = vunpack.c.h.b16 %v186
    %v269 = vunpack.c.l.b16 %v187
    %v270 = vunpack.c.h.b16 %v187
    %v271 = vunpack.c.l.b16 %v188
    %v272 = vunpack.c.h.b16 %v188
    %v273 = vunpack.c.l.b16 %v189
    %v274 = vunpack.c.h.b16 %v189
    %v275 = vunpack.c.l.b16 %v190
    %v276 = vunpack.c.h.b16 %v190
    %v277 = vunpack.c.l.b16 %v191
    %v278 = vunpack.c.h.b16 %v191
    %v279 = vunpack.c.l.b16 %v192
    %v280 = vunpack.c.h.b16 %v192
    %v281 = vunpack.c.l.b16 %v193
    %v282 = vunpack.c.h.b16 %v193
    %v283 = vunpack.c.l.b16 %v194
    %v284 = vunpack.c.h.b16 %v194
    %v285 = vunpack.c.l.b16 %v195
    %v286 = vunpack.c.h.b16 %v195
    %v287 = vunpack.c.l.b16 %v196
    %v288 = vunpack.c.h.b16 %v196
    %v289 = vunpack.c.l.b16 %v197
    %v290 = vunpack.c.h.b16 %v197
    %v291 = vunpack.c.l.b16 %v198
    %v292 = vunpack.c.h.b16 %v198
    %v293 = vunpack.c.l.b16 %v199
    %v294 = vunpack.c.h.b16 %v199
    %v295 = vunpack.c.l.b16 %v200
    %v296 = vunpack.c.h.b16 %v200
    %v297 = vunpack.c.l.b16 %v201
    %v298 = vunpack.c.h.b16 %v201
    %v299 = vunpack.c.l.b16 %v202
    %v300 = vunpack.c.h.b16 %v202
    %v301 = vunpack.c.l.b16 %v203
    %v302 = vunpack.c.h.b16 %v203
    %v303 = vunpack.c.l.b16 %v204
    %v304 = vunpack.c.h.b16 %v204
    %v305 = vunpack.c.l.b16 %v205
    %v306 = vunpack.c.h.b16 %v205
    %v307 = vunpack.c.l.b16 %v206
    %v308 = vunpack.c.h.b16 %v206
    %v309 = vunpack.c.l.b16 %v207
    %v310 = vunpack.c.h.b16 %v207
    %v311 = vunpack.c.l.b16 %v208
    %v312 = vunpack.c.h.b16 %v208
    %v313 = vunpack.c.l.b16 %v209
    %v314 = vunpack.c.h.b16 %v209
    %v315 = vunpack.c.l.b16 %v210
    %v316 = vunpack.c.h.b16 %v210
    %v317 = vunpack.c.l.b16 %v211
    %v318 = vunpack.c.h.b16 %v211
    %v319 = vunpack.c.l.b16 %v212
    %v320 = vunpack.c.h.b16 %v212
    %v321 = vpack.c.b16 %v259, %v257
    %v322 = vpack.c.b16 %v260, %v258
    %v323 = vpack.c.b16 %v263, %v261
    %v324 = vpack.c.b16 %v264, %v262
    %v325 = vpack.c.b16 %v267, %v265
    %v326 = vpack.c.b16 %v268, %v266
    %v327 = vpack.c.b16 %v271, %v269
    %v328 = vpack.c.b16 %v272, %v270
    %v329 = vpack.c.b16 %v275, %v273
    %v330 = vpack.c.b16 %v276, %v274
    %v331 = vpack.c.b16 %v279, %v277
    %v332 = vpack.c.b16 %v280, %v278
    %v333 = vpack.c.b16 %v283, %v281
    %v334 = vpack.c.b16 %v284, %v282
    %v335 = vpack.c.b16 %v287, %v285
    %v336 = vpack.c.b16 %v288, %v286
    %v337 = vpack.c.b16 %v291, %v289
    %v338 = vpack.c.b16 %v292, %v290
    %v339 = vpack.c.b16 %v295, %v293
    %v340 = vpack.c.b16 %v296, %v294
    %v341 = vpack.c.b16 %v299, %v297
    %v342 = vpack.c.b16 %v300, %v298
    %v343 = vpack.c.b16 %v303, %v301
    %v344 = vpack.c.b16 %v304, %v302
    %v345 = vpack.c.b16 %v307, %v305
    %v346 = vpack.c.b16 %v308, %v306
    %v347 = vpack.c.b16 %v311, %v309
    %v348 = vpack.c.b16 %v312, %v310
    %v349 = vpack.c.b16 %v315, %v313
    %v350 = vpack.c.b16 %v316, %v314
    %v351 = vpack.c.b16 %v319, %v317
    %v352 = vpack.c.b16 %v320, %v318
    %385 = vmatprep.subr.bf16.mxu0 %v336
    %386 = vmatpush1.bf16.msra.mxu0 %v335
    %387 = vmatprep.subr.bf16.mxu0 %v334
    %388 = vmatpush1.bf16.msra.mxu0 %v333
    %389 = vmatprep.subr.bf16.mxu0 %v332
    %390 = vmatpush1.bf16.msra.mxu0 %v331
    %391 = vmatprep.subr.bf16.mxu0 %v330
    %392 = vmatpush1.bf16.msra.mxu0 %v329
    %393 = vmatprep.subr.bf16.mxu0 %v328
    %394 = vmatpush1.bf16.msra.mxu0 %v327
    %395 = vmatprep.subr.bf16.mxu0 %v326
    %396 = vmatpush1.bf16.msra.mxu0 %v325
    %397 = vmatprep.subr.bf16.mxu0 %v324
    %398 = vmatpush1.bf16.msra.mxu0 %v323
    %399 = vmatprep.subr.bf16.mxu0 %v322
    %400 = vmatpush1.bf16.msra.mxu0 %v321
    %401 = vmatprep.subr.bf16.mxu0 %v352
    %402 = vmatpush2.bf16.msra.mxu0 %v351
    %403 = vmatprep.subr.bf16.mxu0 %v350
    %404 = vmatpush2.bf16.msra.mxu0 %v349
    %405 = vmatprep.subr.bf16.mxu0 %v348
    %406 = vmatpush2.bf16.msra.mxu0 %v347
    %407 = vmatprep.subr.bf16.mxu0 %v346
    %408 = vmatpush2.bf16.msra.mxu0 %v345
    %409 = vmatprep.subr.bf16.mxu0 %v344
    %410 = vmatpush2.bf16.msra.mxu0 %v343
    %411 = vmatprep.subr.bf16.mxu0 %v342
    %412 = vmatpush2.bf16.msra.mxu0 %v341
    %413 = vmatprep.subr.bf16.mxu0 %v340
    %414 = vmatpush2.bf16.msra.mxu0 %v339
    %415 = vmatprep.subr.bf16.mxu0 %v338
    %416 = vmatpush2.bf16.msra.mxu0 %v337
    %417 = vmatprep.mubr.bf16.mxu0 %v180
    %418 = vmatmul.mubr.bf16.gmra.mxu0 %v179
    %v419 = vpop.f32.mrf.mxu0
    %v420 = vadd.f32 %v218, %v419
    %v421 = vpop.f32.mrf.mxu0
    %v422 = vadd.f32 %v222, %v421
    %v423 = vpop.f32.mrf.mxu0
    %v424 = vpop.f32.mrf.mxu0
    %425 = vdwg.mxu0
    %v426 = vmul.f32 %v420, 0.5
    %v427 = vmul.f32 %v422, 0.5
    %v428 = vmul.f32 %v420, 0.044715
    %v429 = vmul.f32 %v422, 0.044715
    %v430 = vmul.f32 %v428, %v420
    %v431 = vmul.f32 %v429, %v422
    %v432 = vmul.f32 %v430, %v420
    %v433 = vmul.f32 %v431, %v422
    %v434 = vadd.f32 %v420, %v432
    %v435 = vadd.f32 %v422, %v433
    %v436 = vmul.f32 %v434, 0.7978846
    %v437 = vmul.f32 %v435, 0.7978846
    %v438 = vtanh.pop %v436
    %v439 = vtanh.pop %v437
    %v440 = vadd.f32 %v438, 1.0
    %v441 = vadd.f32 %v439, 1.0
    %v442 = vmul.f32 %v426, %v440
    %v443 = vmul.f32 %v427, %v441
    %v444 = vadd.f32 %v442, %v177
    %v445 = vadd.f32 %v443, %v178
    %v446 = vpack.c.bf16 %v444, %v444
    %v447 = vpack.c.bf16 %v445, %v445
    %v448 = vld [vmem:[#allocation10] sm:$0xff]
    %v449 = vld [vmem:[#allocation10 + $0x8] sm:$0xff]
    %v450 = vld [vmem:[#allocation10 + $0x10] sm:$0xff]
    %v451 = vld [vmem:[#allocation10 + $0x18] sm:$0xff]
    %v452 = vld [vmem:[#allocation10 + $0x20] sm:$0xff]
    %v453 = vld [vmem:[#allocation10 + $0x28] sm:$0xff]
    %v454 = vld [vmem:[#allocation10 + $0x30] sm:$0xff]
    %v455 = vld [vmem:[#allocation10 + $0x38] sm:$0xff]
    %v456 = vld [vmem:[#allocation10 + $0x40] sm:$0xff]
    %v457 = vld [vmem:[#allocation10 + $0x48] sm:$0xff]
    %v458 = vld [vmem:[#allocation10 + $0x50] sm:$0xff]
    %v459 = vld [vmem:[#allocation10 + $0x58] sm:$0xff]
    %v460 = vld [vmem:[#allocation10 + $0x60] sm:$0xff]
    %v461 = vld [vmem:[#allocation10 + $0x68] sm:$0xff]
    %v462 = vld [vmem:[#allocation10 + $0x70] sm:$0xff]
    %v463 = vld [vmem:[#allocation10 + $0x78] sm:$0xff]
    %v464 = vld [vmem:[#allocation10 + $0x80] sm:$0xff]
    %v465 = vld [vmem:[#allocation10 + $0x88] sm:$0xff]
    %v466 = vld [vmem:[#allocation10 + $0x90] sm:$0xff]
    %v467 = vld [vmem:[#allocation10 + $0x98] sm:$0xff]
    %v468 = vld [vmem:[#allocation10 + $0xa0] sm:$0xff]
    %v469 = vld [vmem:[#allocation10 + $0xa8] sm:$0xff]
    %v470 = vld [vmem:[#allocation10 + $0xb0] sm:$0xff]
    %v471 = vld [vmem:[#allocation10 + $0xb8] sm:$0xff]
    %v472 = vld [vmem:[#allocation10 + $0xc0] sm:$0xff]
    %v473 = vld [vmem:[#allocation10 + $0xc8] sm:$0xff]
    %v474 = vld [vmem:[#allocation10 + $0xd0] sm:$0xff]
    %v475 = vld [vmem:[#allocation10 + $0xd8] sm:$0xff]
    %v476 = vld [vmem:[#allocation10 + $0xe0] sm:$0xff]
    %v477 = vld [vmem:[#allocation10 + $0xe8] sm:$0xff]
    %v478 = vld [vmem:[#allocation10 + $0xf0] sm:$0xff]
    %v479 = vld [vmem:[#allocation10 + $0xf8] sm:$0xff]
    %v480 = vld [vmem:[#allocation11] sm:$0x3]
    %v482 = vlaneseq
    %v483 = vshrl.u32 %v482, 7
    %v484 = vsub.s32 0, %v483
    %v485 = vrot.slane %v480, %v484
    %v486 = vlaneseq
    %v487 = vshrl.u32 %v486, 7
    %v488 = vsub.s32 1, %v487
    %v489 = vrot.slane %v480, %v488
    %v524 = vunpack.c.l.b16 %v448
    %v525 = vunpack.c.h.b16 %v448
    %v526 = vunpack.c.l.b16 %v449
    %v527 = vunpack.c.h.b16 %v449
    %v528 = vunpack.c.l.b16 %v450
    %v529 = vunpack.c.h.b16 %v450
    %v530 = vunpack.c.l.b16 %v451
    %v531 = vunpack.c.h.b16 %v451
    %v532 = vunpack.c.l.b16 %v452
    %v533 = vunpack.c.h.b16 %v452
    %v534 = vunpack.c.l.b16 %v453
    %v535 = vunpack.c.h.b16 %v453
    %v536 = vunpack.c.l.b16 %v454
    %v537 = vunpack.c.h.b16 %v454
    %v538 = vunpack.c.l.b16 %v455
    %v539 = vunpack.c.h.b16 %v455
    %v540 = vunpack.c.l.b16 %v456
    %v541 = vunpack.c.h.b16 %v456
    %v542 = vunpack.c.l.b16 %v457
    %v543 = vunpack.c.h.b16 %v457
    %v544 = vunpack.c.l.b16 %v458
    %v545 = vunpack.c.h.b16 %v458
    %v546 = vunpack.c.l.b16 %v459
    %v547 = vunpack.c.h.b16 %v459
    %v548 = vunpack.c.l.b16 %v460
    %v549 = vunpack.c.h.b16 %v460
    %v550 = vunpack.c.l.b16 %v461
    %v551 = vunpack.c.h.b16 %v461
    %v552 = vunpack.c.l.b16 %v462
    %v553 = vunpack.c.h.b16 %v462
    %v554 = vunpack.c.l.b16 %v463
    %v555 = vunpack.c.h.b16 %v463
    %v556 = vunpack.c.l.b16 %v464
    %v557 = vunpack.c.h.b16 %v464
    %v558 = vunpack.c.l.b16 %v465
    %v559 = vunpack.c.h.b16 %v465
    %v560 = vunpack.c.l.b16 %v466
    %v561 = vunpack.c.h.b16 %v466
    %v562 = vunpack.c.l.b16 %v467
    %v563 = vunpack.c.h.b16 %v467
    %v564 = vunpack.c.l.b16 %v468
    %v565 = vunpack.c.h.b16 %v468
    %v566 = vunpack.c.l.b16 %v469
    %v567 = vunpack.c.h.b16 %v469
    %v568 = vunpack.c.l.b16 %v470
    %v569 = vunpack.c.h.b16 %v470
    %v570 = vunpack.c.l.b16 %v471
    %v571 = vunpack.c.h.b16 %v471
    %v572 = vunpack.c.l.b16 %v472
    %v573 = vunpack.c.h.b16 %v472
    %v574 = vunpack.c.l.b16 %v473
    %v575 = vunpack.c.h.b16 %v473
    %v576 = vunpack.c.l.b16 %v474
    %v577 = vunpack.c.h.b16 %v474
    %v578 = vunpack.c.l.b16 %v475
    %v579 = vunpack.c.h.b16 %v475
    %v580 = vunpack.c.l.b16 %v476
    %v581 = vunpack.c.h.b16 %v476
    %v582 = vunpack.c.l.b16 %v477
    %v583 = vunpack.c.h.b16 %v477
    %v584 = vunpack.c.l.b16 %v478
    %v585 = vunpack.c.h.b16 %v478
    %v586 = vunpack.c.l.b16 %v479
    %v587 = vunpack.c.h.b16 %v479
    %v588 = vpack.c.b16 %v526, %v524
    %v589 = vpack.c.b16 %v527, %v525
    %v590 = vpack.c.b16 %v530, %v528
    %v591 = vpack.c.b16 %v531, %v529
    %v592 = vpack.c.b16 %v534, %v532
    %v593 = vpack.c.b16 %v535, %v533
    %v594 = vpack.c.b16 %v538, %v536
    %v595 = vpack.c.b16 %v539, %v537
    %v596 = vpack.c.b16 %v542, %v540
    %v597 = vpack.c.b16 %v543, %v541
    %v598 = vpack.c.b16 %v546, %v544
    %v599 = vpack.c.b16 %v547, %v545
    %v600 = vpack.c.b16 %v550, %v548
    %v601 = vpack.c.b16 %v551, %v549
    %v602 = vpack.c.b16 %v554, %v552
    %v603 = vpack.c.b16 %v555, %v553
    %v604 = vpack.c.b16 %v558, %v556
    %v605 = vpack.c.b16 %v559, %v557
    %v606 = vpack.c.b16 %v562, %v560
    %v607 = vpack.c.b16 %v563, %v561
    %v608 = vpack.c.b16 %v566, %v564
    %v609 = vpack.c.b16 %v567, %v565
    %v610 = vpack.c.b16 %v570, %v568
    %v611 = vpack.c.b16 %v571, %v569
    %v612 = vpack.c.b16 %v574, %v572
    %v613 = vpack.c.b16 %v575, %v573
    %v614 = vpack.c.b16 %v578, %v576
    %v615 = vpack.c.b16 %v579, %v577
    %v616 = vpack.c.b16 %v582, %v580
    %v617 = vpack.c.b16 %v583, %v581
    %v618 = vpack.c.b16 %v586, %v584
    %v619 = vpack.c.b16 %v587, %v585
    %652 = vmatprep.subr.bf16.mxu0 %v603
    %653 = vmatpush1.bf16.msra.mxu0 %v602
    %654 = vmatprep.subr.bf16.mxu0 %v601
    %655 = vmatpush1.bf16.msra.mxu0 %v600
    %656 = vmatprep.subr.bf16.mxu0 %v599
    %657 = vmatpush1.bf16.msra.mxu0 %v598
    %658 = vmatprep.subr.bf16.mxu0 %v597
    %659 = vmatpush1.bf16.msra.mxu0 %v596
    %660 = vmatprep.subr.bf16.mxu0 %v595
    %661 = vmatpush1.bf16.msra.mxu0 %v594
    %662 = vmatprep.subr.bf16.mxu0 %v593
    %663 = vmatpush1.bf16.msra.mxu0 %v592
    %664 = vmatprep.subr.bf16.mxu0 %v591
    %665 = vmatpush1.bf16.msra.mxu0 %v590
    %666 = vmatprep.subr.bf16.mxu0 %v589
    %667 = vmatpush1.bf16.msra.mxu0 %v588
    %668 = vmatprep.subr.bf16.mxu0 %v619
    %669 = vmatpush2.bf16.msra.mxu0 %v618
    %670 = vmatprep.subr.bf16.mxu0 %v617
    %671 = vmatpush2.bf16.msra.mxu0 %v616
    %672 = vmatprep.subr.bf16.mxu0 %v615
    %673 = vmatpush2.bf16.msra.mxu0 %v614
    %674 = vmatprep.subr.bf16.mxu0 %v613
    %675 = vmatpush2.bf16.msra.mxu0 %v612
    %676 = vmatprep.subr.bf16.mxu0 %v611
    %677 = vmatpush2.bf16.msra.mxu0 %v610
    %678 = vmatprep.subr.bf16.mxu0 %v609
    %679 = vmatpush2.bf16.msra.mxu0 %v608
    %680 = vmatprep.subr.bf16.mxu0 %v607
    %681 = vmatpush2.bf16.msra.mxu0 %v606
    %682 = vmatprep.subr.bf16.mxu0 %v605
    %683 = vmatpush2.bf16.msra.mxu0 %v604
    %684 = vmatprep.mubr.bf16.mxu0 %v447
    %685 = vmatmul.mubr.bf16.gmra.mxu0 %v446
    %v686 = vpop.f32.mrf.mxu0
    %v687 = vadd.f32 %v485, %v686
    %v688 = vpop.f32.mrf.mxu0
    %v689 = vadd.f32 %v489, %v688
    %v690 = vpop.f32.mrf.mxu0
    %v691 = vpop.f32.mrf.mxu0
    %692 = vdwg.mxu0
    %v693 = vmul.f32 %v687, 0.5
    %v694 = vmul.f32 %v689, 0.5
    %v695 = vmul.f32 %v687, 0.044715
    %v696 = vmul.f32 %v689, 0.044715
    %v697 = vmul.f32 %v695, %v687
    %v698 = vmul.f32 %v696, %v689
    %v699 = vmul.f32 %v697, %v687
    %v700 = vmul.f32 %v698, %v689
    %v701 = vadd.f32 %v687, %v699
    %v702 = vadd.f32 %v689, %v700
    %v703 = vmul.f32 %v701, 0.7978846
    %v704 = vmul.f32 %v702, 0.7978846
    %v705 = vtanh.pop %v703
    %v706 = vtanh.pop %v704
    %v707 = vadd.f32 %v705, 1.0
    %v708 = vadd.f32 %v706, 1.0
    %v709 = vmul.f32 %v693, %v707
    %v710 = vmul.f32 %v694, %v708
    %v711 = vadd.f32 %v709, %v444
    %v712 = vadd.f32 %v710, %v445
    %v713 = vpack.c.bf16 %v711, %v711
    %v714 = vpack.c.bf16 %v712, %v712
    %v715 = vld [vmem:[#allocation13] sm:$0xf]
    %v716 = vld [vmem:[#allocation13 + $0x4] sm:$0xf]
    %v717 = vld [vmem:[#allocation13 + $0x8] sm:$0xf]
    %v718 = vld [vmem:[#allocation13 + $0xc] sm:$0xf]
    %v719 = vld [vmem:[#allocation13 + $0x10] sm:$0xf]
    %v720 = vld [vmem:[#allocation13 + $0x14] sm:$0xf]
    %v721 = vld [vmem:[#allocation13 + $0x18] sm:$0xf]
    %v722 = vld [vmem:[#allocation13 + $0x1c] sm:$0xf]
    %v723 = vld [vmem:[#allocation13 + $0x20] sm:$0xf]
    %v724 = vld [vmem:[#allocation13 + $0x24] sm:$0xf]
    %v725 = vld [vmem:[#allocation13 + $0x28] sm:$0xf]
    %v726 = vld [vmem:[#allocation13 + $0x2c] sm:$0xf]
    %v727 = vld [vmem:[#allocation13 + $0x30] sm:$0xf]
    %v728 = vld [vmem:[#allocation13 + $0x34] sm:$0xf]
    %v729 = vld [vmem:[#allocation13 + $0x38] sm:$0xf]
    %v730 = vld [vmem:[#allocation13 + $0x3c] sm:$0xf]
    %v731 = vld [vmem:[#allocation13 + $0x40] sm:$0xf]
    %v732 = vld [vmem:[#allocation13 + $0x44] sm:$0xf]
    %v733 = vld [vmem:[#allocation13 + $0x48] sm:$0xf]
    %v734 = vld [vmem:[#allocation13 + $0x4c] sm:$0xf]
    %v735 = vld [vmem:[#allocation13 + $0x50] sm:$0xf]
    %v736 = vld [vmem:[#allocation13 + $0x54] sm:$0xf]
    %v737 = vld [vmem:[#allocation13 + $0x58] sm:$0xf]
    %v738 = vld [vmem:[#allocation13 + $0x5c] sm:$0xf]
    %v739 = vld [vmem:[#allocation13 + $0x60] sm:$0xf]
    %v740 = vld [vmem:[#allocation13 + $0x64] sm:$0xf]
    %v741 = vld [vmem:[#allocation13 + $0x68] sm:$0xf]
    %v742 = vld [vmem:[#allocation13 + $0x6c] sm:$0xf]
    %v743 = vld [vmem:[#allocation13 + $0x70] sm:$0xf]
    %v744 = vld [vmem:[#allocation13 + $0x74] sm:$0xf]
    %v745 = vld [vmem:[#allocation13 + $0x78] sm:$0xf]
    %v746 = vld [vmem:[#allocation13 + $0x7c] sm:$0xf]
    %v747 = vld [vmem:[%s8] sm:$0x1]
    %v749 = vlaneseq
    %v750 = vshrl.u32 %v749, 7
    %v751 = vsub.s32 0, %v750
    %v752 = vrot.slane %v747, %v751
    %v786 = vunpack.c.l.b16 %v715
    %v787 = vunpack.c.l.b16 %v716
    %v788 = vunpack.c.l.b16 %v717
    %v789 = vunpack.c.l.b16 %v718
    %v790 = vunpack.c.l.b16 %v719
    %v791 = vunpack.c.l.b16 %v720
    %v792 = vunpack.c.l.b16 %v721
    %v793 = vunpack.c.l.b16 %v722
    %v794 = vunpack.c.l.b16 %v723
    %v795 = vunpack.c.l.b16 %v724
    %v796 = vunpack.c.l.b16 %v725
    %v797 = vunpack.c.l.b16 %v726
    %v798 = vunpack.c.l.b16 %v727
    %v799 = vunpack.c.l.b16 %v728
    %v800 = vunpack.c.l.b16 %v729
    %v801 = vunpack.c.l.b16 %v730
    %v802 = vunpack.c.l.b16 %v731
    %v803 = vunpack.c.l.b16 %v732
    %v804 = vunpack.c.l.b16 %v733
    %v805 = vunpack.c.l.b16 %v734
    %v806 = vunpack.c.l.b16 %v735
    %v807 = vunpack.c.l.b16 %v736
    %v808 = vunpack.c.l.b16 %v737
    %v809 = vunpack.c.l.b16 %v738
    %v810 = vunpack.c.l.b16 %v739
    %v811 = vunpack.c.l.b16 %v740
    %v812 = vunpack.c.l.b16 %v741
    %v813 = vunpack.c.l.b16 %v742
    %v814 = vunpack.c.l.b16 %v743
    %v815 = vunpack.c.l.b16 %v744
    %v816 = vunpack.c.l.b16 %v745
    %v817 = vunpack.c.l.b16 %v746
    %v818 = vpack.c.b16 %v787, %v786
    %v819 = vpack.c.b16 %v789, %v788
    %v820 = vpack.c.b16 %v791, %v790
    %v821 = vpack.c.b16 %v793, %v792
    %v822 = vpack.c.b16 %v795, %v794
    %v823 = vpack.c.b16 %v797, %v796
    %v824 = vpack.c.b16 %v799, %v798
    %v825 = vpack.c.b16 %v801, %v800
    %v826 = vpack.c.b16 %v803, %v802
    %v827 = vpack.c.b16 %v805, %v804
    %v828 = vpack.c.b16 %v807, %v806
    %v829 = vpack.c.b16 %v809, %v808
    %v830 = vpack.c.b16 %v811, %v810
    %v831 = vpack.c.b16 %v813, %v812
    %v832 = vpack.c.b16 %v815, %v814
    %v833 = vpack.c.b16 %v817, %v816
    %850 = vmatprep.subr.bf16.mxu0 0
    %851 = vmatpush1.bf16.msra.mxu0 %v825
    %852 = vmatprep.subr.bf16.mxu0 0
    %853 = vmatpush1.bf16.msra.mxu0 %v824
    %854 = vmatprep.subr.bf16.mxu0 0
    %855 = vmatpush1.bf16.msra.mxu0 %v823
    %856 = vmatprep.subr.bf16.mxu0 0
    %857 = vmatpush1.bf16.msra.mxu0 %v822
    %858 = vmatprep.subr.bf16.mxu0 0
    %859 = vmatpush1.bf16.msra.mxu0 %v821
    %860 = vmatprep.subr.bf16.mxu0 0
    %861 = vmatpush1.bf16.msra.mxu0 %v820
    %862 = vmatprep.subr.bf16.mxu0 0
    %863 = vmatpush1.bf16.msra.mxu0 %v819
    %864 = vmatprep.subr.bf16.mxu0 0
    %865 = vmatpush1.bf16.msra.mxu0 %v818
    %866 = vmatprep.subr.bf16.mxu0 0
    %867 = vmatpush2.bf16.msra.mxu0 %v833
    %868 = vmatprep.subr.bf16.mxu0 0
    %869 = vmatpush2.bf16.msra.mxu0 %v832
    %870 = vmatprep.subr.bf16.mxu0 0
    %871 = vmatpush2.bf16.msra.mxu0 %v831
    %872 = vmatprep.subr.bf16.mxu0 0
    %873 = vmatpush2.bf16.msra.mxu0 %v830
    %874 = vmatprep.subr.bf16.mxu0 0
    %875 = vmatpush2.bf16.msra.mxu0 %v829
    %876 = vmatprep.subr.bf16.mxu0 0
    %877 = vmatpush2.bf16.msra.mxu0 %v828
    %878 = vmatprep.subr.bf16.mxu0 0
    %879 = vmatpush2.bf16.msra.mxu0 %v827
    %880 = vmatprep.subr.bf16.mxu0 0
    %881 = vmatpush2.bf16.msra.mxu0 %v826
    %882 = vmatprep.mubr.bf16.mxu0 %v714
    %883 = vmatmul.mubr.bf16.gmra.mxu0 %v713
    %v884 = vpop.f32.mrf.mxu0
    %v885 = vadd.f32 %v752, %v884
    %v886 = vpop.f32.mrf.mxu0
    %v887 = vpop.f32.mrf.mxu0
    %v888 = vpop.f32.mrf.mxu0
    %889 = vdwg.mxu0
    %v890 = vld [vmem:[%s9] sm:$0x1]
    %v892 = vlaneseq
    %v893 = vshrl.u32 %v892, 7
    %v894 = vsub.s32 0, %v893
    %v895 = vrot.slane %v890, %v894
    %v897 = vmul.f32 %v885, %v895
    %v898 = vadd.f32 %v897, 0.0
    %s899 = scalar_lea.vmem [#allocation2], 16
    %v900 = vld [vmem:[%s899] sm:$0xff]
    %v901 = vld [vmem:[%s899 + $0x8] sm:$0xff]
    %v902 = vadd.f32 %v900, %v901
    %903 = vadd.xlane.f32.xlu0 %v902
    %v904 = vpop.xlane.xlu0 %903
    %v905 = vmul.f32 %v904, %v137
    %v906 = vsub.f32 %v900, %v905
    %v907 = vsub.f32 %v901, %v905
    %v908 = vmul.f32 %v906, %v906
    %v909 = vmul.f32 %v907, %v907
    %v910 = vadd.f32 %v908, %v909
    %911 = vadd.xlane.f32.xlu0 %v910
    %v912 = vpop.xlane.xlu0 %911
    %v913 = vmul.f32 %v912, %v137
    %v914 = vadd.f32 %v913, 1e-05
    %v915 = vrsqrt.pop %v914
    %v916 = vmul.f32 %v906, %v915
    %v917 = vmul.f32 %v907, %v915
    %s918 = scalar_lea.vmem [#allocation5], 2
    %v919 = vld [vmem:[%s918] sm:$0x3]
    %v921 = vlaneseq
    %v922 = vshrl.u32 %v921, 7
    %v923 = vsub.s32 0, %v922
    %v924 = vrot.slane %v919, %v923
    %v925 = vlaneseq
    %v926 = vshrl.u32 %v925, 7
    %v927 = vsub.s32 1, %v926
    %v928 = vrot.slane %v919, %v927
    %v931 = vmul.f32 %v916, %v924
    %v932 = vmul.f32 %v917, %v928
    %s933 = scalar_lea.vmem [#allocation7], 2
    %v934 = vld [vmem:[%s933] sm:$0x3]
    %v936 = vlaneseq
    %v937 = vshrl.u32 %v936, 7
    %v938 = vsub.s32 0, %v937
    %v939 = vrot.slane %v934, %v938
    %v940 = vlaneseq
    %v941 = vshrl.u32 %v940, 7
    %v942 = vsub.s32 1, %v941
    %v943 = vrot.slane %v934, %v942
    %v946 = vadd.f32 %v931, %v939
    %v947 = vadd.f32 %v932, %v943
    %v948 = vpack.c.bf16 %v946, %v946
    %v949 = vpack.c.bf16 %v947, %v947
    %s950 = scalar_lea.vmem [#allocation8], 256
    %v951 = vld [vmem:[%s950] sm:$0xff]
    %v952 = vld [vmem:[%s950 + $0x8] sm:$0xff]
    %v953 = vld [vmem:[%s950 + $0x10] sm:$0xff]
    %v954 = vld [vmem:[%s950 + $0x18] sm:$0xff]
    %v955 = vld [vmem:[%s950 + $0x20] sm:$0xff]
    %v956 = vld [vmem:[%s950 + $0x28] sm:$0xff]
    %v957 = vld [vmem:[%s950 + $0x30] sm:$0xff]
    %v958 = vld [vmem:[%s950 + $0x38] sm:$0xff]
    %v959 = vld [vmem:[%s950 + $0x40] sm:$0xff]
    %v960 = vld [vmem:[%s950 + $0x48] sm:$0xff]
    %v961 = vld [vmem:[%s950 + $0x50] sm:$0xff]
    %v962 = vld [vmem:[%s950 + $0x58] sm:$0xff]
    %v963 = vld [vmem:[%s950 + $0x60] sm:$0xff]
    %v964 = vld [vmem:[%s950 + $0x68] sm:$0xff]
    %v965 = vld [vmem:[%s950 + $0x70] sm:$0xff]
    %v966 = vld [vmem:[%s950 + $0x78] sm:$0xff]
    %v967 = vld [vmem:[%s950 + $0x80] sm:$0xff]
    %v968 = vld [vmem:[%s950 + $0x88] sm:$0xff]
    %v969 = vld [vmem:[%s950 + $0x90] sm:$0xff]
    %v970 = vld [vmem:[%s950 + $0x98] sm:$0xff]
    %v971 = vld [vmem:[%s950 + $0xa0] sm:$0xff]
    %v972 = vld [vmem:[%s950 + $0xa8] sm:$0xff]
    %v973 = vld [vmem:[%s950 + $0xb0] sm:$0xff]
    %v974 = vld [vmem:[%s950 + $0xb8] sm:$0xff]
    %v975 = vld [vmem:[%s950 + $0xc0] sm:$0xff]
    %v976 = vld [vmem:[%s950 + $0xc8] sm:$0xff]
    %v977 = vld [vmem:[%s950 + $0xd0] sm:$0xff]
    %v978 = vld [vmem:[%s950 + $0xd8] sm:$0xff]
    %v979 = vld [vmem:[%s950 + $0xe0] sm:$0xff]
    %v980 = vld [vmem:[%s950 + $0xe8] sm:$0xff]
    %v981 = vld [vmem:[%s950 + $0xf0] sm:$0xff]
    %v982 = vld [vmem:[%s950 + $0xf8] sm:$0xff]
    %s983 = scalar_lea.vmem %s4, 2
    %v984 = vld [vmem:[%s983] sm:$0x3]
    %v986 = vlaneseq
    %v987 = vshrl.u32 %v986, 7
    %v988 = vsub.s32 0, %v987
    %v989 = vrot.slane %v984, %v988
    %v990 = vlaneseq
    %v991 = vshrl.u32 %v990, 7
    %v992 = vsub.s32 1, %v991
    %v993 = vrot.slane %v984, %v992
    %v1028 = vunpack.c.l.b16 %v951
    %v1029 = vunpack.c.h.b16 %v951
    %v1030 = vunpack.c.l.b16 %v952
    %v1031 = vunpack.c.h.b16 %v952
    %v1032 = vunpack.c.l.b16 %v953
    %v1033 = vunpack.c.h.b16 %v953
    %v1034 = vunpack.c.l.b16 %v954
    %v1035 = vunpack.c.h.b16 %v954
    %v1036 = vunpack.c.l.b16 %v955
    %v1037 = vunpack.c.h.b16 %v955
    %v1038 = vunpack.c.l.b16 %v956
    %v1039 = vunpack.c.h.b16 %v956
    %v1040 = vunpack.c.l.b16 %v957
    %v1041 = vunpack.c.h.b16 %v957
    %v1042 = vunpack.c.l.b16 %v958
    %v1043 = vunpack.c.h.b16 %v958
    %v1044 = vunpack.c.l.b16 %v959
    %v1045 = vunpack.c.h.b16 %v959
    %v1046 = vunpack.c.l.b16 %v960
    %v1047 = vunpack.c.h.b16 %v960
    %v1048 = vunpack.c.l.b16 %v961
    %v1049 = vunpack.c.h.b16 %v961
    %v1050 = vunpack.c.l.b16 %v962
    %v1051 = vunpack.c.h.b16 %v962
    %v1052 = vunpack.c.l.b16 %v963
    %v1053 = vunpack.c.h.b16 %v963
    %v1054 = vunpack.c.l.b16 %v964
    %v1055 = vunpack.c.h.b16 %v964
    %v1056 = vunpack.c.l.b16 %v965
    %v1057 = vunpack.c.h.b16 %v965
    %v1058 = vunpack.c.l.b16 %v966
    %v1059 = vunpack.c.h.b16 %v966
    %v1060 = vunpack.c.l.b16 %v967
    %v1061 = vunpack.c.h.b16 %v967
    %v1062 = vunpack.c.l.b16 %v968
    %v1063 = vunpack.c.h.b16 %v968
    %v1064 = vunpack.c.l.b16 %v969
    %v1065 = vunpack.c.h.b16 %v969
    %v1066 = vunpack.c.l.b16 %v970
    %v1067 = vunpack.c.h.b16 %v970
    %v1068 = vunpack.c.l.b16 %v971
    %v1069 = vunpack.c.h.b16 %v971
    %v1070 = vunpack.c.l.b16 %v972
    %v1071 = vunpack.c.h.b16 %v972
    %v1072 = vunpack.c.l.b16 %v973
    %v1073 = vunpack.c.h.b16 %v973
    %v1074 = vunpack.c.l.b16 %v974
    %v1075 = vunpack.c.h.b16 %v974
    %v1076 = vunpack.c.l.b16 %v975
    %v1077 = vunpack.c.h.b16 %v975
    %v1078 = vunpack.c.l.b16 %v976
    %v1079 = vunpack.c.h.b16 %v976
    %v1080 = vunpack.c.l.b16 %v977
    %v1081 = vunpack.c.h.b16 %v977
    %v1082 = vunpack.c.l.b16 %v978
    %v1083 = vunpack.c.h.b16 %v978
    %v1084 = vunpack.c.l.b16 %v979
    %v1085 = vunpack.c.h.b16 %v979
    %v1086 = vunpack.c.l.b16 %v980
    %v1087 = vunpack.c.h.b16 %v980
    %v1088 = vunpack.c.l.b16 %v981
    %v1089 = vunpack.c.h.b16 %v981
    %v1090 = vunpack.c.l.b16 %v982
    %v1091 = vunpack.c.h.b16 %v982
    %v1092 = vpack.c.b16 %v1030, %v1028
    %v1093 = vpack.c.b16 %v1031, %v1029
    %v1094 = vpack.c.b16 %v1034, %v1032
    %v1095 = vpack.c.b16 %v1035, %v1033
    %v1096 = vpack.c.b16 %v1038, %v1036
    %v1097 = vpack.c.b16 %v1039, %v1037
    %v1098 = vpack.c.b16 %v1042, %v1040
    %v1099 = vpack.c.b16 %v1043, %v1041
    %v1100 = vpack.c.b16 %v1046, %v1044
    %v1101 = vpack.c.b16 %v1047, %v1045
    %v1102 = vpack.c.b16 %v1050, %v1048
    %v1103 = vpack.c.b16 %v1051, %v1049
    %v1104 = vpack.c.b16 %v1054, %v1052
    %v1105 = vpack.c.b16 %v1055, %v1053
    %v1106 = vpack.c.b16 %v1058, %v1056
    %v1107 = vpack.c.b16 %v1059, %v1057
    %v1108 = vpack.c.b16 %v1062, %v1060
    %v1109 = vpack.c.b16 %v1063, %v1061
    %v1110 = vpack.c.b16 %v1066, %v1064
    %v1111 = vpack.c.b16 %v1067, %v1065
    %v1112 = vpack.c.b16 %v1070, %v1068
    %v1113 = vpack.c.b16 %v1071, %v1069
    %v1114 = vpack.c.b16 %v1074, %v1072
    %v1115 = vpack.c.b16 %v1075, %v1073
    %v1116 = vpack.c.b16 %v1078, %v1076
    %v1117 = vpack.c.b16 %v1079, %v1077
    %v1118 = vpack.c.b16 %v1082, %v1080
    %v1119 = vpack.c.b16 %v1083, %v1081
    %v1120 = vpack.c.b16 %v1086, %v1084
    %v1121 = vpack.c.b16 %v1087, %v1085
    %v1122 = vpack.c.b16 %v1090, %v1088
    %v1123 = vpack.c.b16 %v1091, %v1089
    %1156 = vmatprep.subr.bf16.mxu0 %v1107
    %1157 = vmatpush1.bf16.msra.mxu0 %v1106
    %1158 = vmatprep.subr.bf16.mxu0 %v1105
    %1159 = vmatpush1.bf16.msra.mxu0 %v1104
    %1160 = vmatprep.subr.bf16.mxu0 %v1103
    %1161 = vmatpush1.bf16.msra.mxu0 %v1102
    %1162 = vmatprep.subr.bf16.mxu0 %v1101
    %1163 = vmatpush1.bf16.msra.mxu0 %v1100
    %1164 = vmatprep.subr.bf16.mxu0 %v1099
    %1165 = vmatpush1.bf16.msra.mxu0 %v1098
    %1166 = vmatprep.subr.bf16.mxu0 %v1097
    %1167 = vmatpush1.bf16.msra.mxu0 %v1096
    %1168 = vmatprep.subr.bf16.mxu0 %v1095
    %1169 = vmatpush1.bf16.msra.mxu0 %v1094
    %1170 = vmatprep.subr.bf16.mxu0 %v1093
    %1171 = vmatpush1.bf16.msra.mxu0 %v1092
    %1172 = vmatprep.subr.bf16.mxu0 %v1123
    %1173 = vmatpush2.bf16.msra.mxu0 %v1122
    %1174 = vmatprep.subr.bf16.mxu0 %v1121
    %1175 = vmatpush2.bf16.msra.mxu0 %v1120
    %1176 = vmatprep.subr.bf16.mxu0 %v1119
    %1177 = vmatpush2.bf16.msra.mxu0 %v1118
    %1178 = vmatprep.subr.bf16.mxu0 %v1117
    %1179 = vmatpush2.bf16.msra.mxu0 %v1116
    %1180 = vmatprep.subr.bf16.mxu0 %v1115
    %1181 = vmatpush2.bf16.msra.mxu0 %v1114
    %1182 = vmatprep.subr.bf16.mxu0 %v1113
    %1183 = vmatpush2.bf16.msra.mxu0 %v1112
    %1184 = vmatprep.subr.bf16.mxu0 %v1111
    %1185 = vmatpush2.bf16.msra.mxu0 %v1110
    %1186 = vmatprep.subr.bf16.mxu0 %v1109
    %1187 = vmatpush2.bf16.msra.mxu0 %v1108
    %1188 = vmatprep.mubr.bf16.mxu0 %v949
    %1189 = vmatmul.mubr.bf16.gmra.mxu0 %v948
    %v1190 = vpop.f32.mrf.mxu0
    %v1191 = vadd.f32 %v989, %v1190
    %v1192 = vpop.f32.mrf.mxu0
    %v1193 = vadd.f32 %v993, %v1192
    %v1194 = vpop.f32.mrf.mxu0
    %v1195 = vpop.f32.mrf.mxu0
    %1196 = vdwg.mxu0
    %v1197 = vmul.f32 %v1191, 0.5
    %v1198 = vmul.f32 %v1193, 0.5
    %v1199 = vmul.f32 %v1191, 0.044715
    %v1200 = vmul.f32 %v1193, 0.044715
    %v1201 = vmul.f32 %v1199, %v1191
    %v1202 = vmul.f32 %v1200, %v1193
    %v1203 = vmul.f32 %v1201, %v1191
    %v1204 = vmul.f32 %v1202, %v1193
    %v1205 = vadd.f32 %v1191, %v1203
    %v1206 = vadd.f32 %v1193, %v1204
    %v1207 = vmul.f32 %v1205, 0.7978846
    %v1208 = vmul.f32 %v1206, 0.7978846
    %v1209 = vtanh.pop %v1207
    %v1210 = vtanh.pop %v1208
    %v1211 = vadd.f32 %v1209, 1.0
    %v1212 = vadd.f32 %v1210, 1.0
    %v1213 = vmul.f32 %v1197, %v1211
    %v1214 = vmul.f32 %v1198, %v1212
    %v1215 = vadd.f32 %v1213, %v946
    %v1216 = vadd.f32 %v1214, %v947
    %v1217 = vpack.c.bf16 %v1215, %v1215
    %v1218 = vpack.c.bf16 %v1216, %v1216
    %s1219 = scalar_lea.vmem [#allocation10], 256
    %v1220 = vld [vmem:[%s1219] sm:$0xff]
    %v1221 = vld [vmem:[%s1219 + $0x8] sm:$0xff]
    %v1222 = vld [vmem:[%s1219 + $0x10] sm:$0xff]
    %v1223 = vld [vmem:[%s1219 + $0x18] sm:$0xff]
    %v1224 = vld [vmem:[%s1219 + $0x20] sm:$0xff]
    %v1225 = vld [vmem:[%s1219 + $0x28] sm:$0xff]
    %v1226 = vld [vmem:[%s1219 + $0x30] sm:$0xff]
    %v1227 = vld [vmem:[%s1219 + $0x38] sm:$0xff]
    %v1228 = vld [vmem:[%s1219 + $0x40] sm:$0xff]
    %v1229 = vld [vmem:[%s1219 + $0x48] sm:$0xff]
    %v1230 = vld [vmem:[%s1219 + $0x50] sm:$0xff]
    %v1231 = vld [vmem:[%s1219 + $0x58] sm:$0xff]
    %v1232 = vld [vmem:[%s1219 + $0x60] sm:$0xff]
    %v1233 = vld [vmem:[%s1219 + $0x68] sm:$0xff]
    %v1234 = vld [vmem:[%s1219 + $0x70] sm:$0xff]
    %v1235 = vld [vmem:[%s1219 + $0x78] sm:$0xff]
    %v1236 = vld [vmem:[%s1219 + $0x80] sm:$0xff]
    %v1237 = vld [vmem:[%s1219 + $0x88] sm:$0xff]
    %v1238 = vld [vmem:[%s1219 + $0x90] sm:$0xff]
    %v1239 = vld [vmem:[%s1219 + $0x98] sm:$0xff]
    %v1240 = vld [vmem:[%s1219 + $0xa0] sm:$0xff]
    %v1241 = vld [vmem:[%s1219 + $0xa8] sm:$0xff]
    %v1242 = vld [vmem:[%s1219 + $0xb0] sm:$0xff]
    %v1243 = vld [vmem:[%s1219 + $0xb8] sm:$0xff]
    %v1244 = vld [vmem:[%s1219 + $0xc0] sm:$0xff]
    %v1245 = vld [vmem:[%s1219 + $0xc8] sm:$0xff]
    %v1246 = vld [vmem:[%s1219 + $0xd0] sm:$0xff]
    %v1247 = vld [vmem:[%s1219 + $0xd8] sm:$0xff]
    %v1248 = vld [vmem:[%s1219 + $0xe0] sm:$0xff]
    %v1249 = vld [vmem:[%s1219 + $0xe8] sm:$0xff]
    %v1250 = vld [vmem:[%s1219 + $0xf0] sm:$0xff]
    %v1251 = vld [vmem:[%s1219 + $0xf8] sm:$0xff]
    %s1252 = scalar_lea.vmem [#allocation11], 2
    %v1253 = vld [vmem:[%s1252] sm:$0x3]
    %v1255 = vlaneseq
    %v1256 = vshrl.u32 %v1255, 7
    %v1257 = vsub.s32 0, %v1256
    %v1258 = vrot.slane %v1253, %v1257
    %v1259 = vlaneseq
    %v1260 = vshrl.u32 %v1259, 7
    %v1261 = vsub.s32 1, %v1260
    %v1262 = vrot.slane %v1253, %v1261
    %v1297 = vunpack.c.l.b16 %v1220
    %v1298 = vunpack.c.h.b16 %v1220
    %v1299 = vunpack.c.l.b16 %v1221
    %v1300 = vunpack.c.h.b16 %v1221
    %v1301 = vunpack.c.l.b16 %v1222
    %v1302 = vunpack.c.h.b16 %v1222
    %v1303 = vunpack.c.l.b16 %v1223
    %v1304 = vunpack.c.h.b16 %v1223
    %v1305 = vunpack.c.l.b16 %v1224
    %v1306 = vunpack.c.h.b16 %v1224
    %v1307 = vunpack.c.l.b16 %v1225
    %v1308 = vunpack.c.h.b16 %v1225
    %v1309 = vunpack.c.l.b16 %v1226
    %v1310 = vunpack.c.h.b16 %v1226
    %v1311 = vunpack.c.l.b16 %v1227
    %v1312 = vunpack.c.h.b16 %v1227
    %v1313 = vunpack.c.l.b16 %v1228
    %v1314 = vunpack.c.h.b16 %v1228
    %v1315 = vunpack.c.l.b16 %v1229
    %v1316 = vunpack.c.h.b16 %v1229
    %v1317 = vunpack.c.l.b16 %v1230
    %v1318 = vunpack.c.h.b16 %v1230
    %v1319 = vunpack.c.l.b16 %v1231
    %v1320 = vunpack.c.h.b16 %v1231
    %v1321 = vunpack.c.l.b16 %v1232
    %v1322 = vunpack.c.h.b16 %v1232
    %v1323 = vunpack.c.l.b16 %v1233
    %v1324 = vunpack.c.h.b16 %v1233
    %v1325 = vunpack.c.l.b16 %v1234
    %v1326 = vunpack.c.h.b16 %v1234
    %v1327 = vunpack.c.l.b16 %v1235
    %v1328 = vunpack.c.h.b16 %v1235
    %v1329 = vunpack.c.l.b16 %v1236
    %v1330 = vunpack.c.h.b16 %v1236
    %v1331 = vunpack.c.l.b16 %v1237
    %v1332 = vunpack.c.h.b16 %v1237
    %v1333 = vunpack.c.l.b16 %v1238
    %v1334 = vunpack.c.h.b16 %v1238
    %v1335 = vunpack.c.l.b16 %v1239
    %v1336 = vunpack.c.h.b16 %v1239
    %v1337 = vunpack.c.l.b16 %v1240
    %v1338 = vunpack.c.h.b16 %v1240
    %v1339 = vunpack.c.l.b16 %v1241
    %v1340 = vunpack.c.h.b16 %v1241
    %v1341 = vunpack.c.l.b16 %v1242
    %v1342 = vunpack.c.h.b16 %v1242
    %v1343 = vunpack.c.l.b16 %v1243
    %v1344 = vunpack.c.h.b16 %v1243
    %v1345 = vunpack.c.l.b16 %v1244
    %v1346 = vunpack.c.h.b16 %v1244
    %v1347 = vunpack.c.l.b16 %v1245
    %v1348 = vunpack.c.h.b16 %v1245
    %v1349 = vunpack.c.l.b16 %v1246
    %v1350 = vunpack.c.h.b16 %v1246
    %v1351 = vunpack.c.l.b16 %v1247
    %v1352 = vunpack.c.h.b16 %v1247
    %v1353 = vunpack.c.l.b16 %v1248
    %v1354 = vunpack.c.h.b16 %v1248
    %v1355 = vunpack.c.l.b16 %v1249
    %v1356 = vunpack.c.h.b16 %v1249
    %v1357 = vunpack.c.l.b16 %v1250
    %v1358 = vunpack.c.h.b16 %v1250
    %v1359 = vunpack.c.l.b16 %v1251
    %v1360 = vunpack.c.h.b16 %v1251
    %v1361 = vpack.c.b16 %v1299, %v1297
    %v1362 = vpack.c.b16 %v1300, %v1298
    %v1363 = vpack.c.b16 %v1303, %v1301
    %v1364 = vpack.c.b16 %v1304, %v1302
    %v1365 = vpack.c.b16 %v1307, %v1305
    %v1366 = vpack.c.b16 %v1308, %v1306
    %v1367 = vpack.c.b16 %v1311, %v1309
    %v1368 = vpack.c.b16 %v1312, %v1310
    %v1369 = vpack.c.b16 %v1315, %v1313
    %v1370 = vpack.c.b16 %v1316, %v1314
    %v1371 = vpack.c.b16 %v1319, %v1317
    %v1372 = vpack.c.b16 %v1320, %v1318
    %v1373 = vpack.c.b16 %v1323, %v1321
    %v1374 = vpack.c.b16 %v1324, %v1322
    %v1375 = vpack.c.b16 %v1327, %v1325
    %v1376 = vpack.c.b16 %v1328, %v1326
    %v1377 = vpack.c.b16 %v1331, %v1329
    %v1378 = vpack.c.b16 %v1332, %v1330
    %v1379 = vpack.c.b16 %v1335, %v1333
    %v1380 = vpack.c.b16 %v1336, %v1334
    %v1381 = vpack.c.b16 %v1339, %v1337
    %v1382 = vpack.c.b16 %v1340, %v1338
    %v1383 = vpack.c.b16 %v1343, %v1341
    %v1384 = vpack.c.b16 %v1344, %v1342
    %v1385 = vpack.c.b16 %v1347, %v1345
    %v1386 = vpack.c.b16 %v1348, %v1346
    %v1387 = vpack.c.b16 %v1351, %v1349
    %v1388 = vpack.c.b16 %v1352, %v1350
    %v1389 = vpack.c.b16 %v1355, %v1353
    %v1390 = vpack.c.b16 %v1356, %v1354
    %v1391 = vpack.c.b16 %v1359, %v1357
    %v1392 = vpack.c.b16 %v1360, %v1358
    %1425 = vmatprep.subr.bf16.mxu0 %v1376
    %1426 = vmatpush1.bf16.msra.mxu0 %v1375
    %1427 = vmatprep.subr.bf16.mxu0 %v1374
    %1428 = vmatpush1.bf16.msra.mxu0 %v1373
    %1429 = vmatprep.subr.bf16.mxu0 %v1372
    %1430 = vmatpush1.bf16.msra.mxu0 %v1371
    %1431 = vmatprep.subr.bf16.mxu0 %v1370
    %1432 = vmatpush1.bf16.msra.mxu0 %v1369
    %1433 = vmatprep.subr.bf16.mxu0 %v1368
    %1434 = vmatpush1.bf16.msra.mxu0 %v1367
    %1435 = vmatprep.subr.bf16.mxu0 %v1366
    %1436 = vmatpush1.bf16.msra.mxu0 %v1365
    %1437 = vmatprep.subr.bf16.mxu0 %v1364
    %1438 = vmatpush1.bf16.msra.mxu0 %v1363
    %1439 = vmatprep.subr.bf16.mxu0 %v1362
    %1440 = vmatpush1.bf16.msra.mxu0 %v1361
    %1441 = vmatprep.subr.bf16.mxu0 %v1392
    %1442 = vmatpush2.bf16.msra.mxu0 %v1391
    %1443 = vmatprep.subr.bf16.mxu0 %v1390
    %1444 = vmatpush2.bf16.msra.mxu0 %v1389
    %1445 = vmatprep.subr.bf16.mxu0 %v1388
    %1446 = vmatpush2.bf16.msra.mxu0 %v1387
    %1447 = vmatprep.subr.bf16.mxu0 %v1386
    %1448 = vmatpush2.bf16.msra.mxu0 %v1385
    %1449 = vmatprep.subr.bf16.mxu0 %v1384
    %1450 = vmatpush2.bf16.msra.mxu0 %v1383
    %1451 = vmatprep.subr.bf16.mxu0 %v1382
    %1452 = vmatpush2.bf16.msra.mxu0 %v1381
    %1453 = vmatprep.subr.bf16.mxu0 %v1380
    %1454 = vmatpush2.bf16.msra.mxu0 %v1379
    %1455 = vmatprep.subr.bf16.mxu0 %v1378
    %1456 = vmatpush2.bf16.msra.mxu0 %v1377
    %1457 = vmatprep.mubr.bf16.mxu0 %v1218
    %1458 = vmatmul.mubr.bf16.gmra.mxu0 %v1217
    %v1459 = vpop.f32.mrf.mxu0
    %v1460 = vadd.f32 %v1258, %v1459
    %v1461 = vpop.f32.mrf.mxu0
    %v1462 = vadd.f32 %v1262, %v1461
    %v1463 = vpop.f32.mrf.mxu0
    %v1464 = vpop.f32.mrf.mxu0
    %1465 = vdwg.mxu0
    %v1466 = vmul.f32 %v1460, 0.5
    %v1467 = vmul.f32 %v1462, 0.5
    %v1468 = vmul.f32 %v1460, 0.044715
    %v1469 = vmul.f32 %v1462, 0.044715
    %v1470 = vmul.f32 %v1468, %v1460
    %v1471 = vmul.f32 %v1469, %v1462
    %v1472 = vmul.f32 %v1470, %v1460
    %v1473 = vmul.f32 %v1471, %v1462
    %v1474 = vadd.f32 %v1460, %v1472
    %v1475 = vadd.f32 %v1462, %v1473
    %v1476 = vmul.f32 %v1474, 0.7978846
    %v1477 = vmul.f32 %v1475, 0.7978846
    %v1478 = vtanh.pop %v1476
    %v1479 = vtanh.pop %v1477
    %v1480 = vadd.f32 %v1478, 1.0
    %v1481 = vadd.f32 %v1479, 1.0
    %v1482 = vmul.f32 %v1466, %v1480
    %v1483 = vmul.f32 %v1467, %v1481
    %v1484 = vadd.f32 %v1482, %v1215
    %v1485 = vadd.f32 %v1483, %v1216
    %v1486 = vpack.c.bf16 %v1484, %v1484
    %v1487 = vpack.c.bf16 %v1485, %v1485
    %s1488 = scalar_lea.vmem [#allocation13], 128
    %v1489 = vld [vmem:[%s1488] sm:$0xf]
    %v1490 = vld [vmem:[%s1488 + $0x4] sm:$0xf]
    %v1491 = vld [vmem:[%s1488 + $0x8] sm:$0xf]
    %v1492 = vld [vmem:[%s1488 + $0xc] sm:$0xf]
    %v1493 = vld [vmem:[%s1488 + $0x10] sm:$0xf]
    %v1494 = vld [vmem:[%s1488 + $0x14] sm:$0xf]
    %v1495 = vld [vmem:[%s1488 + $0x18] sm:$0xf]
    %v1496 = vld [vmem:[%s1488 + $0x1c] sm:$0xf]
    %v1497 = vld [vmem:[%s1488 + $0x20] sm:$0xf]
    %v1498 = vld [vmem:[%s1488 + $0x24] sm:$0xf]
    %v1499 = vld [vmem:[%s1488 + $0x28] sm:$0xf]
    %v1500 = vld [vmem:[%s1488 + $0x2c] sm:$0xf]
    %v1501 = vld [vmem:[%s1488 + $0x30] sm:$0xf]
    %v1502 = vld [vmem:[%s1488 + $0x34] sm:$0xf]
    %v1503 = vld [vmem:[%s1488 + $0x38] sm:$0xf]
    %v1504 = vld [vmem:[%s1488 + $0x3c] sm:$0xf]
    %v1505 = vld [vmem:[%s1488 + $0x40] sm:$0xf]
    %v1506 = vld [vmem:[%s1488 + $0x44] sm:$0xf]
    %v1507 = vld [vmem:[%s1488 + $0x48] sm:$0xf]
    %v1508 = vld [vmem:[%s1488 + $0x4c] sm:$0xf]
    %v1509 = vld [vmem:[%s1488 + $0x50] sm:$0xf]
    %v1510 = vld [vmem:[%s1488 + $0x54] sm:$0xf]
    %v1511 = vld [vmem:[%s1488 + $0x58] sm:$0xf]
    %v1512 = vld [vmem:[%s1488 + $0x5c] sm:$0xf]
    %v1513 = vld [vmem:[%s1488 + $0x60] sm:$0xf]
    %v1514 = vld [vmem:[%s1488 + $0x64] sm:$0xf]
    %v1515 = vld [vmem:[%s1488 + $0x68] sm:$0xf]
    %v1516 = vld [vmem:[%s1488 + $0x6c] sm:$0xf]
    %v1517 = vld [vmem:[%s1488 + $0x70] sm:$0xf]
    %v1518 = vld [vmem:[%s1488 + $0x74] sm:$0xf]
    %v1519 = vld [vmem:[%s1488 + $0x78] sm:$0xf]
    %v1520 = vld [vmem:[%s1488 + $0x7c] sm:$0xf]
    %s1521 = scalar_lea.vmem %s8, 1
    %v1522 = vld [vmem:[%s1521] sm:$0x1]
    %v1524 = vlaneseq
    %v1525 = vshrl.u32 %v1524, 7
    %v1526 = vsub.s32 0, %v1525
    %v1527 = vrot.slane %v1522, %v1526
    %v1561 = vunpack.c.l.b16 %v1489
    %v1562 = vunpack.c.l.b16 %v1490
    %v1563 = vunpack.c.l.b16 %v1491
    %v1564 = vunpack.c.l.b16 %v1492
    %v1565 = vunpack.c.l.b16 %v1493
    %v1566 = vunpack.c.l.b16 %v1494
    %v1567 = vunpack.c.l.b16 %v1495
    %v1568 = vunpack.c.l.b16 %v1496
    %v1569 = vunpack.c.l.b16 %v1497
    %v1570 = vunpack.c.l.b16 %v1498
    %v1571 = vunpack.c.l.b16 %v1499
    %v1572 = vunpack.c.l.b16 %v1500
    %v1573 = vunpack.c.l.b16 %v1501
    %v1574 = vunpack.c.l.b16 %v1502
    %v1575 = vunpack.c.l.b16 %v1503
    %v1576 = vunpack.c.l.b16 %v1504
    %v1577 = vunpack.c.l.b16 %v1505
    %v1578 = vunpack.c.l.b16 %v1506
    %v1579 = vunpack.c.l.b16 %v1507
    %v1580 = vunpack.c.l.b16 %v1508
    %v1581 = vunpack.c.l.b16 %v1509
    %v1582 = vunpack.c.l.b16 %v1510
    %v1583 = vunpack.c.l.b16 %v1511
    %v1584 = vunpack.c.l.b16 %v1512
    %v1585 = vunpack.c.l.b16 %v1513
    %v1586 = vunpack.c.l.b16 %v1514
    %v1587 = vunpack.c.l.b16 %v1515
    %v1588 = vunpack.c.l.b16 %v1516
    %v1589 = vunpack.c.l.b16 %v1517
    %v1590 = vunpack.c.l.b16 %v1518
    %v1591 = vunpack.c.l.b16 %v1519
    %v1592 = vunpack.c.l.b16 %v1520
    %v1593 = vpack.c.b16 %v1562, %v1561
    %v1594 = vpack.c.b16 %v1564, %v1563
    %v1595 = vpack.c.b16 %v1566, %v1565
    %v1596 = vpack.c.b16 %v1568, %v1567
    %v1597 = vpack.c.b16 %v1570, %v1569
    %v1598 = vpack.c.b16 %v1572, %v1571
    %v1599 = vpack.c.b16 %v1574, %v1573
    %v1600 = vpack.c.b16 %v1576, %v1575
    %v1601 = vpack.c.b16 %v1578, %v1577
    %v1602 = vpack.c.b16 %v1580, %v1579
    %v1603 = vpack.c.b16 %v1582, %v1581
    %v1604 = vpack.c.b16 %v1584, %v1583
    %v1605 = vpack.c.b16 %v1586, %v1585
    %v1606 = vpack.c.b16 %v1588, %v1587
    %v1607 = vpack.c.b16 %v1590, %v1589
    %v1608 = vpack.c.b16 %v1592, %v1591
    %1625 = vmatprep.subr.bf16.mxu0 0
    %1626 = vmatpush1.bf16.msra.mxu0 %v1600
    %1627 = vmatprep.subr.bf16.mxu0 0
    %1628 = vmatpush1.bf16.msra.mxu0 %v1599
    %1629 = vmatprep.subr.bf16.mxu0 0
    %1630 = vmatpush1.bf16.msra.mxu0 %v1598
    %1631 = vmatprep.subr.bf16.mxu0 0
    %1632 = vmatpush1.bf16.msra.mxu0 %v1597
    %1633 = vmatprep.subr.bf16.mxu0 0
    %1634 = vmatpush1.bf16.msra.mxu0 %v1596
    %1635 = vmatprep.subr.bf16.mxu0 0
    %1636 = vmatpush1.bf16.msra.mxu0 %v1595
    %1637 = vmatprep.subr.bf16.mxu0 0
    %1638 = vmatpush1.bf16.msra.mxu0 %v1594
    %1639 = vmatprep.subr.bf16.mxu0 0
    %1640 = vmatpush1.bf16.msra.mxu0 %v1593
    %1641 = vmatprep.subr.bf16.mxu0 0
    %1642 = vmatpush2.bf16.msra.mxu0 %v1608
    %1643 = vmatprep.subr.bf16.mxu0 0
    %1644 = vmatpush2.bf16.msra.mxu0 %v1607
    %1645 = vmatprep.subr.bf16.mxu0 0
    %1646 = vmatpush2.bf16.msra.mxu0 %v1606
    %1647 = vmatprep.subr.bf16.mxu0 0
    %1648 = vmatpush2.bf16.msra.mxu0 %v1605
    %1649 = vmatprep.subr.bf16.mxu0 0
    %1650 = vmatpush2.bf16.msra.mxu0 %v1604
    %1651 = vmatprep.subr.bf16.mxu0 0
    %1652 = vmatpush2.bf16.msra.mxu0 %v1603
    %1653 = vmatprep.subr.bf16.mxu0 0
    %1654 = vmatpush2.bf16.msra.mxu0 %v1602
    %1655 = vmatprep.subr.bf16.mxu0 0
    %1656 = vmatpush2.bf16.msra.mxu0 %v1601
    %1657 = vmatprep.mubr.bf16.mxu0 %v1487
    %1658 = vmatmul.mubr.bf16.gmra.mxu0 %v1486
    %v1659 = vpop.f32.mrf.mxu0
    %v1660 = vadd.f32 %v1527, %v1659
    %v1661 = vpop.f32.mrf.mxu0
    %v1662 = vpop.f32.mrf.mxu0
    %v1663 = vpop.f32.mrf.mxu0
    %1664 = vdwg.mxu0
    %s1665 = scalar_lea.vmem %s9, 1
    %v1666 = vld [vmem:[%s1665] sm:$0x1]
    %v1668 = vlaneseq
    %v1669 = vshrl.u32 %v1668, 7
    %v1670 = vsub.s32 0, %v1669
    %v1671 = vrot.slane %v1666, %v1670
    %v1673 = vmul.f32 %v1660, %v1671
    %v1674 = vadd.f32 %v898, %v1673
    %s1675 = scalar_lea.vmem [#allocation2], 32
    %v1676 = vld [vmem:[%s1675] sm:$0xff]
    %v1677 = vld [vmem:[%s1675 + $0x8] sm:$0xff]
    %v1678 = vadd.f32 %v1676, %v1677
    %1679 = vadd.xlane.f32.xlu0 %v1678
    %v1680 = vpop.xlane.xlu0 %1679
    %v1681 = vmul.f32 %v1680, %v137
    %v1682 = vsub.f32 %v1676, %v1681
    %v1683 = vsub.f32 %v1677, %v1681
    %v1684 = vmul.f32 %v1682, %v1682
    %v1685 = vmul.f32 %v1683, %v1683
    %v1686 = vadd.f32 %v1684, %v1685
    %1687 = vadd.xlane.f32.xlu0 %v1686
    %v1688 = vpop.xlane.xlu0 %1687
    %v1689 = vmul.f32 %v1688, %v137
    %v1690 = vadd.f32 %v1689, 1e-05
    %v1691 = vrsqrt.pop %v1690
    %v1692 = vmul.f32 %v1682, %v1691
    %v1693 = vmul.f32 %v1683, %v1691
    %s1694 = scalar_lea.vmem [#allocation5], 4
    %v1695 = vld [vmem:[%s1694] sm:$0x3]
    %v1697 = vlaneseq
    %v1698 = vshrl.u32 %v1697, 7
    %v1699 = vsub.s32 0, %v1698
    %v1700 = vrot.slane %v1695, %v1699
    %v1701 = vlaneseq
    %v1702 = vshrl.u32 %v1701, 7
    %v1703 = vsub.s32 1, %v1702
    %v1704 = vrot.slane %v1695, %v1703
    %v1707 = vmul.f32 %v1692, %v1700
    %v1708 = vmul.f32 %v1693, %v1704
    %s1709 = scalar_lea.vmem [#allocation7], 4
    %v1710 = vld [vmem:[%s1709] sm:$0x3]
    %v1712 = vlaneseq
    %v1713 = vshrl.u32 %v1712, 7
    %v1714 = vsub.s32 0, %v1713
    %v1715 = vrot.slane %v1710, %v1714
    %v1716 = vlaneseq
    %v1717 = vshrl.u32 %v1716, 7
    %v1718 = vsub.s32 1, %v1717
    %v1719 = vrot.slane %v1710, %v1718
    %v1722 = vadd.f32 %v1707, %v1715
    %v1723 = vadd.f32 %v1708, %v1719
    %v1724 = vpack.c.bf16 %v1722, %v1722
    %v1725 = vpack.c.bf16 %v1723, %v1723
    %s1726 = scalar_lea.vmem [#allocation8], 512
    %v1727 = vld [vmem:[%s1726] sm:$0xff]
    %v1728 = vld [vmem:[%s1726 + $0x8] sm:$0xff]
    %v1729 = vld [vmem:[%s1726 + $0x10] sm:$0xff]
    %v1730 = vld [vmem:[%s1726 + $0x18] sm:$0xff]
    %v1731 = vld [vmem:[%s1726 + $0x20] sm:$0xff]
    %v1732 = vld [vmem:[%s1726 + $0x28] sm:$0xff]
    %v1733 = vld [vmem:[%s1726 + $0x30] sm:$0xff]
    %v1734 = vld [vmem:[%s1726 + $0x38] sm:$0xff]
    %v1735 = vld [vmem:[%s1726 + $0x40] sm:$0xff]
    %v1736 = vld [vmem:[%s1726 + $0x48] sm:$0xff]
    %v1737 = vld [vmem:[%s1726 + $0x50] sm:$0xff]
    %v1738 = vld [vmem:[%s1726 + $0x58] sm:$0xff]
    %v1739 = vld [vmem:[%s1726 + $0x60] sm:$0xff]
    %v1740 = vld [vmem:[%s1726 + $0x68] sm:$0xff]
    %v1741 = vld [vmem:[%s1726 + $0x70] sm:$0xff]
    %v1742 = vld [vmem:[%s1726 + $0x78] sm:$0xff]
    %v1743 = vld [vmem:[%s1726 + $0x80] sm:$0xff]
    %v1744 = vld [vmem:[%s1726 + $0x88] sm:$0xff]
    %v1745 = vld [vmem:[%s1726 + $0x90] sm:$0xff]
    %v1746 = vld [vmem:[%s1726 + $0x98] sm:$0xff]
    %v1747 = vld [vmem:[%s1726 + $0xa0] sm:$0xff]
    %v1748 = vld [vmem:[%s1726 + $0xa8] sm:$0xff]
    %v1749 = vld [vmem:[%s1726 + $0xb0] sm:$0xff]
    %v1750 = vld [vmem:[%s1726 + $0xb8] sm:$0xff]
    %v1751 = vld [vmem:[%s1726 + $0xc0] sm:$0xff]
    %v1752 = vld [vmem:[%s1726 + $0xc8] sm:$0xff]
    %v1753 = vld [vmem:[%s1726 + $0xd0] sm:$0xff]
    %v1754 = vld [vmem:[%s1726 + $0xd8] sm:$0xff]
    %v1755 = vld [vmem:[%s1726 + $0xe0] sm:$0xff]
    %v1756 = vld [vmem:[%s1726 + $0xe8] sm:$0xff]
    %v1757 = vld [vmem:[%s1726 + $0xf0] sm:$0xff]
    %v1758 = vld [vmem:[%s1726 + $0xf8] sm:$0xff]
    %s1759 = scalar_lea.vmem %s4, 4
    %v1760 = vld [vmem:[%s1759] sm:$0x3]
    %v1762 = vlaneseq
    %v1763 = vshrl.u32 %v1762, 7
    %v1764 = vsub.s32 0, %v1763
    %v1765 = vrot.slane %v1760, %v1764
    %v1766 = vlaneseq
    %v1767 = vshrl.u32 %v1766, 7
    %v1768 = vsub.s32 1, %v1767
    %v1769 = vrot.slane %v1760, %v1768
    %v1804 = vunpack.c.l.b16 %v1727
    %v1805 = vunpack.c.h.b16 %v1727
    %v1806 = vunpack.c.l.b16 %v1728
    %v1807 = vunpack.c.h.b16 %v1728
    %v1808 = vunpack.c.l.b16 %v1729
    %v1809 = vunpack.c.h.b16 %v1729
    %v1810 = vunpack.c.l.b16 %v1730
    %v1811 = vunpack.c.h.b16 %v1730
    %v1812 = vunpack.c.l.b16 %v1731
    %v1813 = vunpack.c.h.b16 %v1731
    %v1814 = vunpack.c.l.b16 %v1732
    %v1815 = vunpack.c.h.b16 %v1732
    %v1816 = vunpack.c.l.b16 %v1733
    %v1817 = vunpack.c.h.b16 %v1733
    %v1818 = vunpack.c.l.b16 %v1734
    %v1819 = vunpack.c.h.b16 %v1734
    %v1820 = vunpack.c.l.b16 %v1735
    %v1821 = vunpack.c.h.b16 %v1735
    %v1822 = vunpack.c.l.b16 %v1736
    %v1823 = vunpack.c.h.b16 %v1736
    %v1824 = vunpack.c.l.b16 %v1737
    %v1825 = vunpack.c.h.b16 %v1737
    %v1826 = vunpack.c.l.b16 %v1738
    %v1827 = vunpack.c.h.b16 %v1738
    %v1828 = vunpack.c.l.b16 %v1739
    %v1829 = vunpack.c.h.b16 %v1739
    %v1830 = vunpack.c.l.b16 %v1740
    %v1831 = vunpack.c.h.b16 %v1740
    %v1832 = vunpack.c.l.b16 %v1741
    %v1833 = vunpack.c.h.b16 %v1741
    %v1834 = vunpack.c.l.b16 %v1742
    %v1835 = vunpack.c.h.b16 %v1742
    %v1836 = vunpack.c.l.b16 %v1743
    %v1837 = vunpack.c.h.b16 %v1743
    %v1838 = vunpack.c.l.b16 %v1744
    %v1839 = vunpack.c.h.b16 %v1744
    %v1840 = vunpack.c.l.b16 %v1745
    %v1841 = vunpack.c.h.b16 %v1745
    %v1842 = vunpack.c.l.b16 %v1746
    %v1843 = vunpack.c.h.b16 %v1746
    %v1844 = vunpack.c.l.b16 %v1747
    %v1845 = vunpack.c.h.b16 %v1747
    %v1846 = vunpack.c.l.b16 %v1748
    %v1847 = vunpack.c.h.b16 %v1748
    %v1848 = vunpack.c.l.b16 %v1749
    %v1849 = vunpack.c.h.b16 %v1749
    %v1850 = vunpack.c.l.b16 %v1750
    %v1851 = vunpack.c.h.b16 %v1750
    %v1852 = vunpack.c.l.b16 %v1751
    %v1853 = vunpack.c.h.b16 %v1751
    %v1854 = vunpack.c.l.b16 %v1752
    %v1855 = vunpack.c.h.b16 %v1752
    %v1856 = vunpack.c.l.b16 %v1753
    %v1857 = vunpack.c.h.b16 %v1753
    %v1858 = vunpack.c.l.b16 %v1754
    %v1859 = vunpack.c.h.b16 %v1754
    %v1860 = vunpack.c.l.b16 %v1755
    %v1861 = vunpack.c.h.b16 %v1755
    %v1862 = vunpack.c.l.b16 %v1756
    %v1863 = vunpack.c.h.b16 %v1756
    %v1864 = vunpack.c.l.b16 %v1757
    %v1865 = vunpack.c.h.b16 %v1757
    %v1866 = vunpack.c.l.b16 %v1758
    %v1867 = vunpack.c.h.b16 %v1758
    %v1868 = vpack.c.b16 %v1806, %v1804
    %v1869 = vpack.c.b16 %v1807, %v1805
    %v1870 = vpack.c.b16 %v1810, %v1808
    %v1871 = vpack.c.b16 %v1811, %v1809
    %v1872 = vpack.c.b16 %v1814, %v1812
    %v1873 = vpack.c.b16 %v1815, %v1813
    %v1874 = vpack.c.b16 %v1818, %v1816
    %v1875 = vpack.c.b16 %v1819, %v1817
    %v1876 = vpack.c.b16 %v1822, %v1820
    %v1877 = vpack.c.b16 %v1823, %v1821
    %v1878 = vpack.c.b16 %v1826, %v1824
    %v1879 = vpack.c.b16 %v1827, %v1825
    %v1880 = vpack.c.b16 %v1830, %v1828
    %v1881 = vpack.c.b16 %v1831, %v1829
    %v1882 = vpack.c.b16 %v1834, %v1832
    %v1883 = vpack.c.b16 %v1835, %v1833
    %v1884 = vpack.c.b16 %v1838, %v1836
    %v1885 = vpack.c.b16 %v1839, %v1837
    %v1886 = vpack.c.b16 %v1842, %v1840
    %v1887 = vpack.c.b16 %v1843, %v1841
    %v1888 = vpack.c.b16 %v1846, %v1844
    %v1889 = vpack.c.b16 %v1847, %v1845
    %v1890 = vpack.c.b16 %v1850, %v1848
    %v1891 = vpack.c.b16 %v1851, %v1849
    %v1892 = vpack.c.b16 %v1854, %v1852
    %v1893 = vpack.c.b16 %v1855, %v1853
    %v1894 = vpack.c.b16 %v1858, %v1856
    %v1895 = vpack.c.b16 %v1859, %v1857
    %v1896 = vpack.c.b16 %v1862, %v1860
    %v1897 = vpack.c.b16 %v1863, %v1861
    %v1898 = vpack.c.b16 %v1866, %v1864
    %v1899 = vpack.c.b16 %v1867, %v1865
    %1932 = vmatprep.subr.bf16.mxu0 %v1883
    %1933 = vmatpush1.bf16.msra.mxu0 %v1882
    %1934 = vmatprep.subr.bf16.mxu0 %v1881
    %1935 = vmatpush1.bf16.msra.mxu0 %v1880
    %1936 = vmatprep.subr.bf16.mxu0 %v1879
    %1937 = vmatpush1.bf16.msra.mxu0 %v1878
    %1938 = vmatprep.subr.bf16.mxu0 %v1877
    %1939 = vmatpush1.bf16.msra.mxu0 %v1876
    %1940 = vmatprep.subr.bf16.mxu0 %v1875
    %1941 = vmatpush1.bf16.msra.mxu0 %v1874
    %1942 = vmatprep.subr.bf16.mxu0 %v1873
    %1943 = vmatpush1.bf16.msra.mxu0 %v1872
    %1944 = vmatprep.subr.bf16.mxu0 %v1871
    %1945 = vmatpush1.bf16.msra.mxu0 %v1870
    %1946 = vmatprep.subr.bf16.mxu0 %v1869
    %1947 = vmatpush1.bf16.msra.mxu0 %v1868
    %1948 = vmatprep.subr.bf16.mxu0 %v1899
    %1949 = vmatpush2.bf16.msra.mxu0 %v1898
    %1950 = vmatprep.subr.bf16.mxu0 %v1897
    %1951 = vmatpush2.bf16.msra.mxu0 %v1896
    %1952 = vmatprep.subr.bf16.mxu0 %v1895
    %1953 = vmatpush2.bf16.msra.mxu0 %v1894
    %1954 = vmatprep.subr.bf16.mxu0 %v1893
    %1955 = vmatpush2.bf16.msra.mxu0 %v1892
    %1956 = vmatprep.subr.bf16.mxu0 %v1891
    %1957 = vmatpush2.bf16.msra.mxu0 %v1890
    %1958 = vmatprep.subr.bf16.mxu0 %v1889
    %1959 = vmatpush2.bf16.msra.mxu0 %v1888
    %1960 = vmatprep.subr.bf16.mxu0 %v1887
    %1961 = vmatpush2.bf16.msra.mxu0 %v1886
    %1962 = vmatprep.subr.bf16.mxu0 %v1885
    %1963 = vmatpush2.bf16.msra.mxu0 %v1884
    %1964 = vmatprep.mubr.bf16.mxu0 %v1725
    %1965 = vmatmul.mubr.bf16.gmra.mxu0 %v1724
    %v1966 = vpop.f32.mrf.mxu0
    %v1967 = vadd.f32 %v1765, %v1966
    %v1968 = vpop.f32.mrf.mxu0
    %v1969 = vadd.f32 %v1769, %v1968
    %v1970 = vpop.f32.mrf.mxu0
    %v1971 = vpop.f32.mrf.mxu0
    %1972 = vdwg.mxu0
    %v1973 = vmul.f32 %v1967, 0.5
    %v1974 = vmul.f32 %v1969, 0.5
    %v1975 = vmul.f32 %v1967, 0.044715
    %v1976 = vmul.f32 %v1969, 0.044715
    %v1977 = vmul.f32 %v1975, %v1967
    %v1978 = vmul.f32 %v1976, %v1969
    %v1979 = vmul.f32 %v1977, %v1967
    %v1980 = vmul.f32 %v1978, %v1969
    %v1981 = vadd.f32 %v1967, %v1979
    %v1982 = vadd.f32 %v1969, %v1980
    %v1983 = vmul.f32 %v1981, 0.7978846
    %v1984 = vmul.f32 %v1982, 0.7978846
    %v1985 = vtanh.pop %v1983
    %v1986 = vtanh.pop %v1984
    %v1987 = vadd.f32 %v1985, 1.0
    %v1988 = vadd.f32 %v1986, 1.0
    %v1989 = vmul.f32 %v1973, %v1987
    %v1990 = vmul.f32 %v1974, %v1988
    %v1991 = vadd.f32 %v1989, %v1722
    %v1992 = vadd.f32 %v1990, %v1723
    %v1993 = vpack.c.bf16 %v1991, %v1991
    %v1994 = vpack.c.bf16 %v1992, %v1992
    %s1995 = scalar_lea.vmem [#allocation10], 512
    %v1996 = vld [vmem:[%s1995] sm:$0xff]
    %v1997 = vld [vmem:[%s1995 + $0x8] sm:$0xff]
    %v1998 = vld [vmem:[%s1995 + $0x10] sm:$0xff]
    %v1999 = vld [vmem:[%s1995 + $0x18] sm:$0xff]
    %v2000 = vld [vmem:[%s1995 + $0x20] sm:$0xff]
    %v2001 = vld [vmem:[%s1995 + $0x28] sm:$0xff]
    %v2002 = vld [vmem:[%s1995 + $0x30] sm:$0xff]
    %v2003 = vld [vmem:[%s1995 + $0x38] sm:$0xff]
    %v2004 = vld [vmem:[%s1995 + $0x40] sm:$0xff]
    %v2005 = vld [vmem:[%s1995 + $0x48] sm:$0xff]
    %v2006 = vld [vmem:[%s1995 + $0x50] sm:$0xff]
    %v2007 = vld [vmem:[%s1995 + $0x58] sm:$0xff]
    %v2008 = vld [vmem:[%s1995 + $0x60] sm:$0xff]
    %v2009 = vld [vmem:[%s1995 + $0x68] sm:$0xff]
    %v2010 = vld [vmem:[%s1995 + $0x70] sm:$0xff]
    %v2011 = vld [vmem:[%s1995 + $0x78] sm:$0xff]
    %v2012 = vld [vmem:[%s1995 + $0x80] sm:$0xff]
    %v2013 = vld [vmem:[%s1995 + $0x88] sm:$0xff]
    %v2014 = vld [vmem:[%s1995 + $0x90] sm:$0xff]
    %v2015 = vld [vmem:[%s1995 + $0x98] sm:$0xff]
    %v2016 = vld [vmem:[%s1995 + $0xa0] sm:$0xff]
    %v2017 = vld [vmem:[%s1995 + $0xa8] sm:$0xff]
    %v2018 = vld [vmem:[%s1995 + $0xb0] sm:$0xff]
    %v2019 = vld [vmem:[%s1995 + $0xb8] sm:$0xff]
    %v2020 = vld [vmem:[%s1995 + $0xc0] sm:$0xff]
    %v2021 = vld [vmem:[%s1995 + $0xc8] sm:$0xff]
    %v2022 = vld [vmem:[%s1995 + $0xd0] sm:$0xff]
    %v2023 = vld [vmem:[%s1995 + $0xd8] sm:$0xff]
    %v2024 = vld [vmem:[%s1995 + $0xe0] sm:$0xff]
    %v2025 = vld [vmem:[%s1995 + $0xe8] sm:$0xff]
    %v2026 = vld [vmem:[%s1995 + $0xf0] sm:$0xff]
    %v2027 = vld [vmem:[%s1995 + $0xf8] sm:$0xff]
    %s2028 = scalar_lea.vmem [#allocation11], 4
    %v2029 = vld [vmem:[%s2028] sm:$0x3]
    %v2031 = vlaneseq
    %v2032 = vshrl.u32 %v2031, 7
    %v2033 = vsub.s32 0, %v2032
    %v2034 = vrot.slane %v2029, %v2033
    %v2035 = vlaneseq
    %v2036 = vshrl.u32 %v2035, 7
    %v2037 = vsub.s32 1, %v2036
    %v2038 = vrot.slane %v2029, %v2037
    %v2073 = vunpack.c.l.b16 %v1996
    %v2074 = vunpack.c.h.b16 %v1996
    %v2075 = vunpack.c.l.b16 %v1997
    %v2076 = vunpack.c.h.b16 %v1997
    %v2077 = vunpack.c.l.b16 %v1998
    %v2078 = vunpack.c.h.b16 %v1998
    %v2079 = vunpack.c.l.b16 %v1999
    %v2080 = vunpack.c.h.b16 %v1999
    %v2081 = vunpack.c.l.b16 %v2000
    %v2082 = vunpack.c.h.b16 %v2000
    %v2083 = vunpack.c.l.b16 %v2001
    %v2084 = vunpack.c.h.b16 %v2001
    %v2085 = vunpack.c.l.b16 %v2002
    %v2086 = vunpack.c.h.b16 %v2002
    %v2087 = vunpack.c.l.b16 %v2003
    %v2088 = vunpack.c.h.b16 %v2003
    %v2089 = vunpack.c.l.b16 %v2004
    %v2090 = vunpack.c.h.b16 %v2004
    %v2091 = vunpack.c.l.b16 %v2005
    %v2092 = vunpack.c.h.b16 %v2005
    %v2093 = vunpack.c.l.b16 %v2006
    %v2094 = vunpack.c.h.b16 %v2006
    %v2095 = vunpack.c.l.b16 %v2007
    %v2096 = vunpack.c.h.b16 %v2007
    %v2097 = vunpack.c.l.b16 %v2008
    %v2098 = vunpack.c.h.b16 %v2008
    %v2099 = vunpack.c.l.b16 %v2009
    %v2100 = vunpack.c.h.b16 %v2009
    %v2101 = vunpack.c.l.b16 %v2010
    %v2102 = vunpack.c.h.b16 %v2010
    %v2103 = vunpack.c.l.b16 %v2011
    %v2104 = vunpack.c.h.b16 %v2011
    %v2105 = vunpack.c.l.b16 %v2012
    %v2106 = vunpack.c.h.b16 %v2012
    %v2107 = vunpack.c.l.b16 %v2013
    %v2108 = vunpack.c.h.b16 %v2013
    %v2109 = vunpack.c.l.b16 %v2014
    %v2110 = vunpack.c.h.b16 %v2014
    %v2111 = vunpack.c.l.b16 %v2015
    %v2112 = vunpack.c.h.b16 %v2015
    %v2113 = vunpack.c.l.b16 %v2016
    %v2114 = vunpack.c.h.b16 %v2016
    %v2115 = vunpack.c.l.b16 %v2017
    %v2116 = vunpack.c.h.b16 %v2017
    %v2117 = vunpack.c.l.b16 %v2018
    %v2118 = vunpack.c.h.b16 %v2018
    %v2119 = vunpack.c.l.b16 %v2019
    %v2120 = vunpack.c.h.b16 %v2019
    %v2121 = vunpack.c.l.b16 %v2020
    %v2122 = vunpack.c.h.b16 %v2020
    %v2123 = vunpack.c.l.b16 %v2021
    %v2124 = vunpack.c.h.b16 %v2021
    %v2125 = vunpack.c.l.b16 %v2022
    %v2126 = vunpack.c.h.b16 %v2022
    %v2127 = vunpack.c.l.b16 %v2023
    %v2128 = vunpack.c.h.b16 %v2023
    %v2129 = vunpack.c.l.b16 %v2024
    %v2130 = vunpack.c.h.b16 %v2024
    %v2131 = vunpack.c.l.b16 %v2025
    %v2132 = vunpack.c.h.b16 %v2025
    %v2133 = vunpack.c.l.b16 %v2026
    %v2134 = vunpack.c.h.b16 %v2026
    %v2135 = vunpack.c.l.b16 %v2027
    %v2136 = vunpack.c.h.b16 %v2027
    %v2137 = vpack.c.b16 %v2075, %v2073
    %v2138 = vpack.c.b16 %v2076, %v2074
    %v2139 = vpack.c.b16 %v2079, %v2077
    %v2140 = vpack.c.b16 %v2080, %v2078
    %v2141 = vpack.c.b16 %v2083, %v2081
    %v2142 = vpack.c.b16 %v2084, %v2082
    %v2143 = vpack.c.b16 %v2087, %v2085
    %v2144 = vpack.c.b16 %v2088, %v2086
    %v2145 = vpack.c.b16 %v2091, %v2089
    %v2146 = vpack.c.b16 %v2092, %v2090
    %v2147 = vpack.c.b16 %v2095, %v2093
    %v2148 = vpack.c.b16 %v2096, %v2094
    %v2149 = vpack.c.b16 %v2099, %v2097
    %v2150 = vpack.c.b16 %v2100, %v2098
    %v2151 = vpack.c.b16 %v2103, %v2101
    %v2152 = vpack.c.b16 %v2104, %v2102
    %v2153 = vpack.c.b16 %v2107, %v2105
    %v2154 = vpack.c.b16 %v2108, %v2106
    %v2155 = vpack.c.b16 %v2111, %v2109
    %v2156 = vpack.c.b16 %v2112, %v2110
    %v2157 = vpack.c.b16 %v2115, %v2113
    %v2158 = vpack.c.b16 %v2116, %v2114
    %v2159 = vpack.c.b16 %v2119, %v2117
    %v2160 = vpack.c.b16 %v2120, %v2118
    %v2161 = vpack.c.b16 %v2123, %v2121
    %v2162 = vpack.c.b16 %v2124, %v2122
    %v2163 = vpack.c.b16 %v2127, %v2125
    %v2164 = vpack.c.b16 %v2128, %v2126
    %v2165 = vpack.c.b16 %v2131, %v2129
    %v2166 = vpack.c.b16 %v2132, %v2130
    %v2167 = vpack.c.b16 %v2135, %v2133
    %v2168 = vpack.c.b16 %v2136, %v2134
    %2201 = vmatprep.subr.bf16.mxu0 %v2152
    %2202 = vmatpush1.bf16.msra.mxu0 %v2151
    %2203 = vmatprep.subr.bf16.mxu0 %v2150
    %2204 = vmatpush1.bf16.msra.mxu0 %v2149
    %2205 = vmatprep.subr.bf16.mxu0 %v2148
    %2206 = vmatpush1.bf16.msra.mxu0 %v2147
    %2207 = vmatprep.subr.bf16.mxu0 %v2146
    %2208 = vmatpush1.bf16.msra.mxu0 %v2145
    %2209 = vmatprep.subr.bf16.mxu0 %v2144
    %2210 = vmatpush1.bf16.msra.mxu0 %v2143
    %2211 = vmatprep.subr.bf16.mxu0 %v2142
    %2212 = vmatpush1.bf16.msra.mxu0 %v2141
    %2213 = vmatprep.subr.bf16.mxu0 %v2140
    %2214 = vmatpush1.bf16.msra.mxu0 %v2139
    %2215 = vmatprep.subr.bf16.mxu0 %v2138
    %2216 = vmatpush1.bf16.msra.mxu0 %v2137
    %2217 = vmatprep.subr.bf16.mxu0 %v2168
    %2218 = vmatpush2.bf16.msra.mxu0 %v2167
    %2219 = vmatprep.subr.bf16.mxu0 %v2166
    %2220 = vmatpush2.bf16.msra.mxu0 %v2165
    %2221 = vmatprep.subr.bf16.mxu0 %v2164
    %2222 = vmatpush2.bf16.msra.mxu0 %v2163
    %2223 = vmatprep.subr.bf16.mxu0 %v2162
    %2224 = vmatpush2.bf16.msra.mxu0 %v2161
    %2225 = vmatprep.subr.bf16.mxu0 %v2160
    %2226 = vmatpush2.bf16.msra.mxu0 %v2159
    %2227 = vmatprep.subr.bf16.mxu0 %v2158
    %2228 = vmatpush2.bf16.msra.mxu0 %v2157
    %2229 = vmatprep.subr.bf16.mxu0 %v2156
    %2230 = vmatpush2.bf16.msra.mxu0 %v2155
    %2231 = vmatprep.subr.bf16.mxu0 %v2154
    %2232 = vmatpush2.bf16.msra.mxu0 %v2153
    %2233 = vmatprep.mubr.bf16.mxu0 %v1994
    %2234 = vmatmul.mubr.bf16.gmra.mxu0 %v1993
    %v2235 = vpop.f32.mrf.mxu0
    %v2236 = vadd.f32 %v2034, %v2235
    %v2237 = vpop.f32.mrf.mxu0
    %v2238 = vadd.f32 %v2038, %v2237
    %v2239 = vpop.f32.mrf.mxu0
    %v2240 = vpop.f32.mrf.mxu0
    %2241 = vdwg.mxu0
    %v2242 = vmul.f32 %v2236, 0.5
    %v2243 = vmul.f32 %v2238, 0.5
    %v2244 = vmul.f32 %v2236, 0.044715
    %v2245 = vmul.f32 %v2238, 0.044715
    %v2246 = vmul.f32 %v2244, %v2236
    %v2247 = vmul.f32 %v2245, %v2238
    %v2248 = vmul.f32 %v2246, %v2236
    %v2249 = vmul.f32 %v2247, %v2238
    %v2250 = vadd.f32 %v2236, %v2248
    %v2251 = vadd.f32 %v2238, %v2249
    %v2252 = vmul.f32 %v2250, 0.7978846
    %v2253 = vmul.f32 %v2251, 0.7978846
    %v2254 = vtanh.pop %v2252
    %v2255 = vtanh.pop %v2253
    %v2256 = vadd.f32 %v2254, 1.0
    %v2257 = vadd.f32 %v2255, 1.0
    %v2258 = vmul.f32 %v2242, %v2256
    %v2259 = vmul.f32 %v2243, %v2257
    %v2260 = vadd.f32 %v2258, %v1991
    %v2261 = vadd.f32 %v2259, %v1992
    %v2262 = vpack.c.bf16 %v2260, %v2260
    %v2263 = vpack.c.bf16 %v2261, %v2261
    %s2264 = scalar_lea.vmem [#allocation13], 256
    %v2265 = vld [vmem:[%s2264] sm:$0xf]
    %v2266 = vld [vmem:[%s2264 + $0x4] sm:$0xf]
    %v2267 = vld [vmem:[%s2264 + $0x8] sm:$0xf]
    %v2268 = vld [vmem:[%s2264 + $0xc] sm:$0xf]
    %v2269 = vld [vmem:[%s2264 + $0x10] sm:$0xf]
    %v2270 = vld [vmem:[%s2264 + $0x14] sm:$0xf]
    %v2271 = vld [vmem:[%s2264 + $0x18] sm:$0xf]
    %v2272 = vld [vmem:[%s2264 + $0x1c] sm:$0xf]
    %v2273 = vld [vmem:[%s2264 + $0x20] sm:$0xf]
    %v2274 = vld [vmem:[%s2264 + $0x24] sm:$0xf]
    %v2275 = vld [vmem:[%s2264 + $0x28] sm:$0xf]
    %v2276 = vld [vmem:[%s2264 + $0x2c] sm:$0xf]
    %v2277 = vld [vmem:[%s2264 + $0x30] sm:$0xf]
    %v2278 = vld [vmem:[%s2264 + $0x34] sm:$0xf]
    %v2279 = vld [vmem:[%s2264 + $0x38] sm:$0xf]
    %v2280 = vld [vmem:[%s2264 + $0x3c] sm:$0xf]
    %v2281 = vld [vmem:[%s2264 + $0x40] sm:$0xf]
    %v2282 = vld [vmem:[%s2264 + $0x44] sm:$0xf]
    %v2283 = vld [vmem:[%s2264 + $0x48] sm:$0xf]
    %v2284 = vld [vmem:[%s2264 + $0x4c] sm:$0xf]
    %v2285 = vld [vmem:[%s2264 + $0x50] sm:$0xf]
    %v2286 = vld [vmem:[%s2264 + $0x54] sm:$0xf]
    %v2287 = vld [vmem:[%s2264 + $0x58] sm:$0xf]
    %v2288 = vld [vmem:[%s2264 + $0x5c] sm:$0xf]
    %v2289 = vld [vmem:[%s2264 + $0x60] sm:$0xf]
    %v2290 = vld [vmem:[%s2264 + $0x64] sm:$0xf]
    %v2291 = vld [vmem:[%s2264 + $0x68] sm:$0xf]
    %v2292 = vld [vmem:[%s2264 + $0x6c] sm:$0xf]
    %v2293 = vld [vmem:[%s2264 + $0x70] sm:$0xf]
    %v2294 = vld [vmem:[%s2264 + $0x74] sm:$0xf]
    %v2295 = vld [vmem:[%s2264 + $0x78] sm:$0xf]
    %v2296 = vld [vmem:[%s2264 + $0x7c] sm:$0xf]
    %s2297 = scalar_lea.vmem %s8, 2
    %v2298 = vld [vmem:[%s2297] sm:$0x1]
    %v2300 = vlaneseq
    %v2301 = vshrl.u32 %v2300, 7
    %v2302 = vsub.s32 0, %v2301
    %v2303 = vrot.slane %v2298, %v2302
    %v2337 = vunpack.c.l.b16 %v2265
    %v2338 = vunpack.c.l.b16 %v2266
    %v2339 = vunpack.c.l.b16 %v2267
    %v2340 = vunpack.c.l.b16 %v2268
    %v2341 = vunpack.c.l.b16 %v2269
    %v2342 = vunpack.c.l.b16 %v2270
    %v2343 = vunpack.c.l.b16 %v2271
    %v2344 = vunpack.c.l.b16 %v2272
    %v2345 = vunpack.c.l.b16 %v2273
    %v2346 = vunpack.c.l.b16 %v2274
    %v2347 = vunpack.c.l.b16 %v2275
    %v2348 = vunpack.c.l.b16 %v2276
    %v2349 = vunpack.c.l.b16 %v2277
    %v2350 = vunpack.c.l.b16 %v2278
    %v2351 = vunpack.c.l.b16 %v2279
    %v2352 = vunpack.c.l.b16 %v2280
    %v2353 = vunpack.c.l.b16 %v2281
    %v2354 = vunpack.c.l.b16 %v2282
    %v2355 = vunpack.c.l.b16 %v2283
    %v2356 = vunpack.c.l.b16 %v2284
    %v2357 = vunpack.c.l.b16 %v2285
    %v2358 = vunpack.c.l.b16 %v2286
    %v2359 = vunpack.c.l.b16 %v2287
    %v2360 = vunpack.c.l.b16 %v2288
    %v2361 = vunpack.c.l.b16 %v2289
    %v2362 = vunpack.c.l.b16 %v2290
    %v2363 = vunpack.c.l.b16 %v2291
    %v2364 = vunpack.c.l.b16 %v2292
    %v2365 = vunpack.c.l.b16 %v2293
    %v2366 = vunpack.c.l.b16 %v2294
    %v2367 = vunpack.c.l.b16 %v2295
    %v2368 = vunpack.c.l.b16 %v2296
    %v2369 = vpack.c.b16 %v2338, %v2337
    %v2370 = vpack.c.b16 %v2340, %v2339
    %v2371 = vpack.c.b16 %v2342, %v2341
    %v2372 = vpack.c.b16 %v2344, %v2343
    %v2373 = vpack.c.b16 %v2346, %v2345
    %v2374 = vpack.c.b16 %v2348, %v2347
    %v2375 = vpack.c.b16 %v2350, %v2349
    %v2376 = vpack.c.b16 %v2352, %v2351
    %v2377 = vpack.c.b16 %v2354, %v2353
    %v2378 = vpack.c.b16 %v2356, %v2355
    %v2379 = vpack.c.b16 %v2358, %v2357
    %v2380 = vpack.c.b16 %v2360, %v2359
    %v2381 = vpack.c.b16 %v2362, %v2361
    %v2382 = vpack.c.b16 %v2364, %v2363
    %v2383 = vpack.c.b16 %v2366, %v2365
    %v2384 = vpack.c.b16 %v2368, %v2367
    %2401 = vmatprep.subr.bf16.mxu0 0
    %2402 = vmatpush1.bf16.msra.mxu0 %v2376
    %2403 = vmatprep.subr.bf16.mxu0 0
    %2404 = vmatpush1.bf16.msra.mxu0 %v2375
    %2405 = vmatprep.subr.bf16.mxu0 0
    %2406 = vmatpush1.bf16.msra.mxu0 %v2374
    %2407 = vmatprep.subr.bf16.mxu0 0
    %2408 = vmatpush1.bf16.msra.mxu0 %v2373
    %2409 = vmatprep.subr.bf16.mxu0 0
    %2410 = vmatpush1.bf16.msra.mxu0 %v2372
    %2411 = vmatprep.subr.bf16.mxu0 0
    %2412 = vmatpush1.bf16.msra.mxu0 %v2371
    %2413 = vmatprep.subr.bf16.mxu0 0
    %2414 = vmatpush1.bf16.msra.mxu0 %v2370
    %2415 = vmatprep.subr.bf16.mxu0 0
    %2416 = vmatpush1.bf16.msra.mxu0 %v2369
    %2417 = vmatprep.subr.bf16.mxu0 0
    %2418 = vmatpush2.bf16.msra.mxu0 %v2384
    %2419 = vmatprep.subr.bf16.mxu0 0
    %2420 = vmatpush2.bf16.msra.mxu0 %v2383
    %2421 = vmatprep.subr.bf16.mxu0 0
    %2422 = vmatpush2.bf16.msra.mxu0 %v2382
    %2423 = vmatprep.subr.bf16.mxu0 0
    %2424 = vmatpush2.bf16.msra.mxu0 %v2381
    %2425 = vmatprep.subr.bf16.mxu0 0
    %2426 = vmatpush2.bf16.msra.mxu0 %v2380
    %2427 = vmatprep.subr.bf16.mxu0 0
    %2428 = vmatpush2.bf16.msra.mxu0 %v2379
    %2429 = vmatprep.subr.bf16.mxu0 0
    %2430 = vmatpush2.bf16.msra.mxu0 %v2378
    %2431 = vmatprep.subr.bf16.mxu0 0
    %2432 = vmatpush2.bf16.msra.mxu0 %v2377
    %2433 = vmatprep.mubr.bf16.mxu0 %v2263
    %2434 = vmatmul.mubr.bf16.gmra.mxu0 %v2262
    %v2435 = vpop.f32.mrf.mxu0
    %v2436 = vadd.f32 %v2303, %v2435
    %v2437 = vpop.f32.mrf.mxu0
    %v2438 = vpop.f32.mrf.mxu0
    %v2439 = vpop.f32.mrf.mxu0
    %2440 = vdwg.mxu0
    %s2441 = scalar_lea.vmem %s9, 2
    %v2442 = vld [vmem:[%s2441] sm:$0x1]
    %v2444 = vlaneseq
    %v2445 = vshrl.u32 %v2444, 7
    %v2446 = vsub.s32 0, %v2445
    %v2447 = vrot.slane %v2442, %v2446
    %v2449 = vmul.f32 %v2436, %v2447
    %v2450 = vadd.f32 %v1674, %v2449
    %2451 = vst [vmem:[#allocation14] sm:$0xff] %v2450
    // Predicated region
    $region70: #{tpu_custom_call.1} parent=1 // pred_check
      _
    $region71: #{tpu_custom_call.1} parent=1 // pred_check_branch
      %2453 = sbr.rel (0) target = $region73
    $region72: #{tpu_custom_call.1} parent=1 // pred_region
      %s2455 = ssub.s32 128, 128
      %2456 = vsyncadd [#allocation4], %s2455
      %s2458 = sshll.u32 [#allocation14], 4
      %s2459 = int_to_ptr.vmem [resolvable:$true] %s2458
      %2461 = dma.vmem_to_hbm [thread:$0]  %s2459, 128, %s10, [#allocation4]
    $region73: #{tpu_custom_call.1} parent=1 // pred_fallthru
      _
    // Predicated region
    $region74: #{tpu_custom_call.1} parent=1 // pred_check
      _
    $region75: #{tpu_custom_call.1} parent=1 // pred_check_branch
      %2463 = sbr.rel (0) target = $region77
    $region76: #{tpu_custom_call.1} parent=1 // pred_region
      %2464 = dma.done [#allocation4], 128
    $region77: #{tpu_custom_call.1} parent=1 // pred_fallthru
      _
    %2465 = vsyncpa [#allocation3], 1
    %2466 = vsyncpa [#allocation6], 1
    %2467 = vsyncpa [#allocation9], 1
    %2468 = vsyncpa [#allocation12], 1
    %2469 = vsyncpa [#allocation4], 1

</llo_original>
